<compile_context>
chip_gen: v6e
topology: v6e:2x2x1
jax: 0.10.0
libtpu: 0.0.40
codegen_flags: <defaults>
</compile_context>

<pallas_src>
import functools

import numpy as np
import jax
import jax.numpy as jnp
from jax.experimental import pallas as pl
from jax.experimental.pallas import tpu as pltpu

KH, KW = 4, 4
C_OUT = 4


def _conv_relu_kernel(x_ref, conv_ref, relu_ref, *, taps):
    # x_ref:    (H, W, B)             block of B images, batch on the lane axis
    # conv_ref: (C_OUT, Ho, Wo, B)
    # relu_ref: (C_OUT, Ho, Wo, B)
    # taps:     numpy (C_OUT, KH, KW) compile-time constants (here all +/-1)
    ho = conv_ref.shape[1]
    wo = conv_ref.shape[2]

    x = x_ref[...]  # (H, W, B)

    # Hoist the 16 shifted windows out of the channel loop: computed once,
    # reused for every output channel.
    wins = [[x[kh:kh + ho, kw:kw + wo, :] for kw in range(KW)]
            for kh in range(KH)]

    for oc in range(C_OUT):
        acc = None
        for kh in range(KH):
            for kw in range(KW):
                t = float(taps[oc, kh, kw])
                if t == 0.0:
                    continue
                win = wins[kh][kw]
                if acc is None:
                    acc = win if t == 1.0 else (-win if t == -1.0 else t * win)
                elif t == 1.0:
                    acc = acc + win
                elif t == -1.0:
                    acc = acc - win
                else:
                    acc = acc + t * win
        if acc is None:  # all-zero filter (never happens here, but stay safe)
            acc = jnp.zeros((ho, wo, x.shape[-1]), dtype=jnp.float32)
        # Lane-dense stores: last dim is the batch block.
        conv_ref[oc] = acc
        relu_ref[oc] = jnp.maximum(acc, 0.0)


def net_forward(x_nchw, weight, *, block_n=256):
    """x_nchw: (N, 1, H, W) float32; weight: (4, 1, 4, 4).
    Returns (conv_x, activated_x), each (N, 4, H-3, W-3) float32 (NCHW),
    matching PyTorch Conv2d(1, 4, (4, 4), bias=False) + relu."""
    n, c_in, h, w = x_nchw.shape
    assert c_in == 1
    ho, wo = h - KH + 1, w - KW + 1

    # The module's filters are fixed +/-1 constants -> bake them in at trace
    # time (requires a concrete weight array, which Net always has).
    taps = np.asarray(jax.device_get(weight), dtype=np.float32).reshape(
        C_OUT, KH, KW)

    # Lane-major layout: (N, 1, H, W) -> (H, W, N) so batch sits on lanes.
    x_hwn = jnp.transpose(x_nchw[:, 0, :, :], (1, 2, 0)).astype(jnp.float32)

    # Batch blocking: one grid step per chunk of `b` images.  When blocking,
    # the lane-dim block size must be a multiple of 128; a single full-extent
    # block is exempt.  block_n=256 keeps double-buffered tiles at a few MiB,
    # comfortably inside scoped VMEM on v5e/v6e (128 MiB) and v7x (64 MiB).
    if n <= block_n:
        b = n
        n_pad = n
    else:
        b = block_n
        assert b % 128 == 0, "blocked lane dim must be a multiple of 128"
        n_pad = ((n + b - 1) // b) * b
    if n_pad != n:
        x_hwn = jnp.pad(x_hwn, ((0, 0), (0, 0), (0, n_pad - n)))

    grid = (n_pad // b,)
    out_shape = jax.ShapeDtypeStruct((C_OUT, ho, wo, n_pad), jnp.float32)

    kernel = functools.partial(_conv_relu_kernel, taps=taps)

    conv_l, relu_l = pl.pallas_call(
        kernel,
        out_shape=(out_shape, out_shape),
        grid_spec=pltpu.PrefetchScalarGridSpec(
            num_scalar_prefetch=0,
            grid=grid,
            in_specs=[pl.BlockSpec((h, w, b), lambda i: (0, 0, i))],
            out_specs=[
                pl.BlockSpec((C_OUT, ho, wo, b), lambda i: (0, 0, 0, i)),
                pl.BlockSpec((C_OUT, ho, wo, b), lambda i: (0, 0, 0, i)),
            ],
        ),
        compiler_params=pltpu.CompilerParams(
            dimension_semantics=("parallel",),   # shard batch chunks (v7x 2 TCs)
            vmem_limit_bytes=48 * 1024 * 1024,
        ),
        cost_estimate=pl.CostEstimate(
            flops=2 * C_OUT * ho * wo * KH * KW * n_pad,
            transcendentals=0,
            bytes_accessed=4 * (h * w * n_pad + 2 * C_OUT * ho * wo * n_pad),
        ),
    )(x_hwn)

    # Back to NCHW, dropping any batch padding.
    conv_x = jnp.transpose(conv_l[..., :n], (3, 0, 1, 2))
    act_x = jnp.transpose(relu_l[..., :n], (3, 0, 1, 2))
    return conv_x, act_x


def _make_weight():
    filter_vals = np.array([[-1, -1, 1, 1],
                            [-1, -1, 1, 1],
                            [-1, -1, 1, 1],
                            [-1, -1, 1, 1]], dtype=np.float32)
    filters = np.stack([filter_vals, -filter_vals,
                        filter_vals.T, -filter_vals.T], axis=0)   # (4, 4, 4)
    return jnp.asarray(filters[:, None, :, :], dtype=jnp.float32)  # (4, 1, 4, 4)


def _reference(x, weight):
    return jax.lax.conv_general_dilated(
        x, weight, window_strides=(1, 1), padding="VALID",
        dimension_numbers=("NCHW", "OIHW", "NCHW"))


if __name__ == "__main__":
    key = jax.random.PRNGKey(0)
    weight = _make_weight()

    # Small demo consistent with the module: batch=2, 1 input channel, 16x16.
    N, H, W = 2, 16, 16
    x = jax.random.normal(key, (N, 1, H, W), dtype=jnp.float32)

    conv_x, act_x = net_forward(x, weight)
    conv_x = jax.block_until_ready(conv_x)
    act_x = jax.block_until_ready(act_x)

    ref = _reference(x, weight)
    np.testing.assert_allclose(np.asarray(conv_x), np.asarray(ref),
                               rtol=1e-5, atol=1e-5)
    np.testing.assert_allclose(np.asarray(act_x),
                               np.maximum(np.asarray(ref), 0.0),
                               rtol=1e-5, atol=1e-5)

    # Exercise the blocked/padded batch path (multiple grid steps).
    k2 = jax.random.split(key)[0]
    x_big = jax.random.normal(k2, (130, 1, H, W), dtype=jnp.float32)
    conv_b, act_b = net_forward(x_big, weight, block_n=128)
    conv_b = jax.block_until_ready(conv_b)
    act_b = jax.block_until_ready(act_b)
    ref_b = _reference(x_big, weight)
    np.testing.assert_allclose(np.asarray(conv_b), np.asarray(ref_b),
                               rtol=1e-5, atol=1e-5)
    np.testing.assert_allclose(np.asarray(act_b),
                               np.maximum(np.asarray(ref_b), 0.0),
                               rtol=1e-5, atol=1e-5)

    print("KERNEL_OK")
</pallas_src>

<mosaic_0001>
module attributes {stable_mosaic.version = 11 : i64} {
  func.func @_conv_relu_kernel(%arg0: i32, %arg1: memref<16x16x2xf32, #tpu.memory_space<vmem>>, %arg2: memref<4x13x13x2xf32, #tpu.memory_space<vmem>>, %arg3: memref<4x13x13x2xf32, #tpu.memory_space<vmem>>) attributes {dimension_semantics = [#tpu.dimension_semantics<parallel>], iteration_bounds = array<i64: 1>, scalar_prefetch = 0 : i64, scratch_operands = 0 : i64, tpu.core_type = #tpu.core_type<tc>, window_params = [{transform_indices = @transform_0, window_bounds = array<i64: 16, 16, 2>}, {transform_indices = @transform_1, window_bounds = array<i64: 4, 13, 13, 2>}, {transform_indices = @transform_2, window_bounds = array<i64: 4, 13, 13, 2>}]} {
    %c0 = arith.constant 0 : index
    %c0_0 = arith.constant 0 : index
    %c0_1 = arith.constant 0 : index
    %0 = vector.load %arg1[%c0, %c0_0, %c0_1] : memref<16x16x2xf32, #tpu.memory_space<vmem>>, vector<16x16x2xf32>
    %1 = vector.extract_strided_slice %0 {offsets = [0, 0, 0], sizes = [13, 13, 2], strides = [1, 1, 1]} : vector<16x16x2xf32> to vector<13x13x2xf32>
    %2 = vector.extract_strided_slice %0 {offsets = [0, 1, 0], sizes = [13, 13, 2], strides = [1, 1, 1]} : vector<16x16x2xf32> to vector<13x13x2xf32>
    %3 = vector.extract_strided_slice %0 {offsets = [0, 2, 0], sizes = [13, 13, 2], strides = [1, 1, 1]} : vector<16x16x2xf32> to vector<13x13x2xf32>
    %4 = vector.extract_strided_slice %0 {offsets = [0, 3, 0], sizes = [13, 13, 2], strides = [1, 1, 1]} : vector<16x16x2xf32> to vector<13x13x2xf32>
    %5 = vector.extract_strided_slice %0 {offsets = [1, 0, 0], sizes = [13, 13, 2], strides = [1, 1, 1]} : vector<16x16x2xf32> to vector<13x13x2xf32>
    %6 = vector.extract_strided_slice %0 {offsets = [1, 1, 0], sizes = [13, 13, 2], strides = [1, 1, 1]} : vector<16x16x2xf32> to vector<13x13x2xf32>
    %7 = vector.extract_strided_slice %0 {offsets = [1, 2, 0], sizes = [13, 13, 2], strides = [1, 1, 1]} : vector<16x16x2xf32> to vector<13x13x2xf32>
    %8 = vector.extract_strided_slice %0 {offsets = [1, 3, 0], sizes = [13, 13, 2], strides = [1, 1, 1]} : vector<16x16x2xf32> to vector<13x13x2xf32>
    %9 = vector.extract_strided_slice %0 {offsets = [2, 0, 0], sizes = [13, 13, 2], strides = [1, 1, 1]} : vector<16x16x2xf32> to vector<13x13x2xf32>
    %10 = vector.extract_strided_slice %0 {offsets = [2, 1, 0], sizes = [13, 13, 2], strides = [1, 1, 1]} : vector<16x16x2xf32> to vector<13x13x2xf32>
    %11 = vector.extract_strided_slice %0 {offsets = [2, 2, 0], sizes = [13, 13, 2], strides = [1, 1, 1]} : vector<16x16x2xf32> to vector<13x13x2xf32>
    %12 = vector.extract_strided_slice %0 {offsets = [2, 3, 0], sizes = [13, 13, 2], strides = [1, 1, 1]} : vector<16x16x2xf32> to vector<13x13x2xf32>
    %13 = vector.extract_strided_slice %0 {offsets = [3, 0, 0], sizes = [13, 13, 2], strides = [1, 1, 1]} : vector<16x16x2xf32> to vector<13x13x2xf32>
    %14 = vector.extract_strided_slice %0 {offsets = [3, 1, 0], sizes = [13, 13, 2], strides = [1, 1, 1]} : vector<16x16x2xf32> to vector<13x13x2xf32>
    %15 = vector.extract_strided_slice %0 {offsets = [3, 2, 0], sizes = [13, 13, 2], strides = [1, 1, 1]} : vector<16x16x2xf32> to vector<13x13x2xf32>
    %16 = vector.extract_strided_slice %0 {offsets = [3, 3, 0], sizes = [13, 13, 2], strides = [1, 1, 1]} : vector<16x16x2xf32> to vector<13x13x2xf32>
    %cst = arith.constant 0.000000e+00 : f32
    %17 = vector.broadcast %cst : f32 to vector<13x13x2xf32>
    %18 = arith.subf %17, %1 : vector<13x13x2xf32>
    %19 = arith.subf %18, %2 : vector<13x13x2xf32>
    %20 = arith.addf %19, %3 : vector<13x13x2xf32>
    %21 = arith.addf %20, %4 : vector<13x13x2xf32>
    %22 = arith.subf %21, %5 : vector<13x13x2xf32>
    %23 = arith.subf %22, %6 : vector<13x13x2xf32>
    %24 = arith.addf %23, %7 : vector<13x13x2xf32>
    %25 = arith.addf %24, %8 : vector<13x13x2xf32>
    %26 = arith.subf %25, %9 : vector<13x13x2xf32>
    %27 = arith.subf %26, %10 : vector<13x13x2xf32>
    %28 = arith.addf %27, %11 : vector<13x13x2xf32>
    %29 = arith.addf %28, %12 : vector<13x13x2xf32>
    %30 = arith.subf %29, %13 : vector<13x13x2xf32>
    %31 = arith.subf %30, %14 : vector<13x13x2xf32>
    %32 = arith.addf %31, %15 : vector<13x13x2xf32>
    %33 = arith.addf %32, %16 : vector<13x13x2xf32>
    %c0_2 = arith.constant 0 : index
    %c0_3 = arith.constant 0 : index
    %c0_4 = arith.constant 0 : index
    %c0_5 = arith.constant 0 : index
    %34 = vector.load %arg2[%c0_2, %c0_3, %c0_4, %c0_5] : memref<4x13x13x2xf32, #tpu.memory_space<vmem>>, vector<1x13x13x2xf32>
    %35 = vector.shape_cast %34 : vector<1x13x13x2xf32> to vector<13x13x2xf32>
    %36 = vector.shape_cast %33 : vector<13x13x2xf32> to vector<1x13x13x2xf32>
    tpu.vector_store %arg2[%c0_2, %c0_3, %c0_4, %c0_5], %36 {strides = array<i32>} : memref<4x13x13x2xf32, #tpu.memory_space<vmem>>, vector<1x13x13x2xf32>,
    %cst_6 = arith.constant 0.000000e+00 : f32
    %37 = vector.broadcast %cst_6 : f32 to vector<13x13x2xf32>
    %38 = arith.maximumf %33, %37 : vector<13x13x2xf32>
    %c0_7 = arith.constant 0 : index
    %c0_8 = arith.constant 0 : index
    %c0_9 = arith.constant 0 : index
    %c0_10 = arith.constant 0 : index
    %39 = vector.load %arg3[%c0_7, %c0_8, %c0_9, %c0_10] : memref<4x13x13x2xf32, #tpu.memory_space<vmem>>, vector<1x13x13x2xf32>
    %40 = vector.shape_cast %39 : vector<1x13x13x2xf32> to vector<13x13x2xf32>
    %41 = vector.shape_cast %38 : vector<13x13x2xf32> to vector<1x13x13x2xf32>
    tpu.vector_store %arg3[%c0_7, %c0_8, %c0_9, %c0_10], %41 {strides = array<i32>} : memref<4x13x13x2xf32, #tpu.memory_space<vmem>>, vector<1x13x13x2xf32>,
    %42 = arith.addf %1, %2 : vector<13x13x2xf32>
    %43 = arith.subf %42, %3 : vector<13x13x2xf32>
    %44 = arith.subf %43, %4 : vector<13x13x2xf32>
    %45 = arith.addf %44, %5 : vector<13x13x2xf32>
    %46 = arith.addf %45, %6 : vector<13x13x2xf32>
    %47 = arith.subf %46, %7 : vector<13x13x2xf32>
    %48 = arith.subf %47, %8 : vector<13x13x2xf32>
    %49 = arith.addf %48, %9 : vector<13x13x2xf32>
    %50 = arith.addf %49, %10 : vector<13x13x2xf32>
    %51 = arith.subf %50, %11 : vector<13x13x2xf32>
    %52 = arith.subf %51, %12 : vector<13x13x2xf32>
    %53 = arith.addf %52, %13 : vector<13x13x2xf32>
    %54 = arith.addf %53, %14 : vector<13x13x2xf32>
    %55 = arith.subf %54, %15 : vector<13x13x2xf32>
    %56 = arith.subf %55, %16 : vector<13x13x2xf32>
    %c1 = arith.constant 1 : index
    %c0_11 = arith.constant 0 : index
    %c0_12 = arith.constant 0 : index
    %c0_13 = arith.constant 0 : index
    %57 = vector.load %arg2[%c1, %c0_11, %c0_12, %c0_13] : memref<4x13x13x2xf32, #tpu.memory_space<vmem>>, vector<1x13x13x2xf32>
    %58 = vector.shape_cast %57 : vector<1x13x13x2xf32> to vector<13x13x2xf32>
    %59 = vector.shape_cast %56 : vector<13x13x2xf32> to vector<1x13x13x2xf32>
    tpu.vector_store %arg2[%c1, %c0_11, %c0_12, %c0_13], %59 {strides = array<i32>} : memref<4x13x13x2xf32, #tpu.memory_space<vmem>>, vector<1x13x13x2xf32>,
    %cst_14 = arith.constant 0.000000e+00 : f32
    %60 = vector.broadcast %cst_14 : f32 to vector<13x13x2xf32>
    %61 = arith.maximumf %56, %60 : vector<13x13x2xf32>
    %c1_15 = arith.constant 1 : index
    %c0_16 = arith.constant 0 : index
    %c0_17 = arith.constant 0 : index
    %c0_18 = arith.constant 0 : index
    %62 = vector.load %arg3[%c1_15, %c0_16, %c0_17, %c0_18] : memref<4x13x13x2xf32, #tpu.memory_space<vmem>>, vector<1x13x13x2xf32>
    %63 = vector.shape_cast %62 : vector<1x13x13x2xf32> to vector<13x13x2xf32>
    %64 = vector.shape_cast %61 : vector<13x13x2xf32> to vector<1x13x13x2xf32>
    tpu.vector_store %arg3[%c1_15, %c0_16, %c0_17, %c0_18], %64 {strides = array<i32>} : memref<4x13x13x2xf32, #tpu.memory_space<vmem>>, vector<1x13x13x2xf32>,
    %cst_19 = arith.constant 0.000000e+00 : f32
    %65 = vector.broadcast %cst_19 : f32 to vector<13x13x2xf32>
    %66 = arith.subf %65, %1 : vector<13x13x2xf32>
    %67 = arith.subf %66, %2 : vector<13x13x2xf32>
    %68 = arith.subf %67, %3 : vector<13x13x2xf32>
    %69 = arith.subf %68, %4 : vector<13x13x2xf32>
    %70 = arith.subf %69, %5 : vector<13x13x2xf32>
    %71 = arith.subf %70, %6 : vector<13x13x2xf32>
    %72 = arith.subf %71, %7 : vector<13x13x2xf32>
    %73 = arith.subf %72, %8 : vector<13x13x2xf32>
    %74 = arith.addf %73, %9 : vector<13x13x2xf32>
    %75 = arith.addf %74, %10 : vector<13x13x2xf32>
    %76 = arith.addf %75, %11 : vector<13x13x2xf32>
    %77 = arith.addf %76, %12 : vector<13x13x2xf32>
    %78 = arith.addf %77, %13 : vector<13x13x2xf32>
    %79 = arith.addf %78, %14 : vector<13x13x2xf32>
    %80 = arith.addf %79, %15 : vector<13x13x2xf32>
    %81 = arith.addf %80, %16 : vector<13x13x2xf32>
    %c2 = arith.constant 2 : index
    %c0_20 = arith.constant 0 : index
    %c0_21 = arith.constant 0 : index
    %c0_22 = arith.constant 0 : index
    %82 = vector.load %arg2[%c2, %c0_20, %c0_21, %c0_22] : memref<4x13x13x2xf32, #tpu.memory_space<vmem>>, vector<1x13x13x2xf32>
    %83 = vector.shape_cast %82 : vector<1x13x13x2xf32> to vector<13x13x2xf32>
    %84 = vector.shape_cast %81 : vector<13x13x2xf32> to vector<1x13x13x2xf32>
    tpu.vector_store %arg2[%c2, %c0_20, %c0_21, %c0_22], %84 {strides = array<i32>} : memref<4x13x13x2xf32, #tpu.memory_space<vmem>>, vector<1x13x13x2xf32>,
    %cst_23 = arith.constant 0.000000e+00 : f32
    %85 = vector.broadcast %cst_23 : f32 to vector<13x13x2xf32>
    %86 = arith.maximumf %81, %85 : vector<13x13x2xf32>
    %c2_24 = arith.constant 2 : index
    %c0_25 = arith.constant 0 : index
    %c0_26 = arith.constant 0 : index
    %c0_27 = arith.constant 0 : index
    %87 = vector.load %arg3[%c2_24, %c0_25, %c0_26, %c0_27] : memref<4x13x13x2xf32, #tpu.memory_space<vmem>>, vector<1x13x13x2xf32>
    %88 = vector.shape_cast %87 : vector<1x13x13x2xf32> to vector<13x13x2xf32>
    %89 = vector.shape_cast %86 : vector<13x13x2xf32> to vector<1x13x13x2xf32>
    tpu.vector_store %arg3[%c2_24, %c0_25, %c0_26, %c0_27], %89 {strides = array<i32>} : memref<4x13x13x2xf32, #tpu.memory_space<vmem>>, vector<1x13x13x2xf32>,
    %90 = arith.addf %1, %2 : vector<13x13x2xf32>
    %91 = arith.addf %90, %3 : vector<13x13x2xf32>
    %92 = arith.addf %91, %4 : vector<13x13x2xf32>
    %93 = arith.addf %92, %5 : vector<13x13x2xf32>
    %94 = arith.addf %93, %6 : vector<13x13x2xf32>
    %95 = arith.addf %94, %7 : vector<13x13x2xf32>
    %96 = arith.addf %95, %8 : vector<13x13x2xf32>
    %97 = arith.subf %96, %9 : vector<13x13x2xf32>
    %98 = arith.subf %97, %10 : vector<13x13x2xf32>
    %99 = arith.subf %98, %11 : vector<13x13x2xf32>
    %100 = arith.subf %99, %12 : vector<13x13x2xf32>
    %101 = arith.subf %100, %13 : vector<13x13x2xf32>
    %102 = arith.subf %101, %14 : vector<13x13x2xf32>
    %103 = arith.subf %102, %15 : vector<13x13x2xf32>
    %104 = arith.subf %103, %16 : vector<13x13x2xf32>
    %c3 = arith.constant 3 : index
    %c0_28 = arith.constant 0 : index
    %c0_29 = arith.constant 0 : index
    %c0_30 = arith.constant 0 : index
    %105 = vector.load %arg2[%c3, %c0_28, %c0_29, %c0_30] : memref<4x13x13x2xf32, #tpu.memory_space<vmem>>, vector<1x13x13x2xf32>
    %106 = vector.shape_cast %105 : vector<1x13x13x2xf32> to vector<13x13x2xf32>
    %107 = vector.shape_cast %104 : vector<13x13x2xf32> to vector<1x13x13x2xf32>
    tpu.vector_store %arg2[%c3, %c0_28, %c0_29, %c0_30], %107 {strides = array<i32>} : memref<4x13x13x2xf32, #tpu.memory_space<vmem>>, vector<1x13x13x2xf32>,
    %cst_31 = arith.constant 0.000000e+00 : f32
    %108 = vector.broadcast %cst_31 : f32 to vector<13x13x2xf32>
    %109 = arith.maximumf %104, %108 : vector<13x13x2xf32>
    %c3_32 = arith.constant 3 : index
    %c0_33 = arith.constant 0 : index
    %c0_34 = arith.constant 0 : index
    %c0_35 = arith.constant 0 : index
    %110 = vector.load %arg3[%c3_32, %c0_33, %c0_34, %c0_35] : memref<4x13x13x2xf32, #tpu.memory_space<vmem>>, vector<1x13x13x2xf32>
    %111 = vector.shape_cast %110 : vector<1x13x13x2xf32> to vector<13x13x2xf32>
    %112 = vector.shape_cast %109 : vector<13x13x2xf32> to vector<1x13x13x2xf32>
    tpu.vector_store %arg3[%c3_32, %c0_33, %c0_34, %c0_35], %112 {strides = array<i32>} : memref<4x13x13x2xf32, #tpu.memory_space<vmem>>, vector<1x13x13x2xf32>,
    return
  }
  func.func @transform_0(%arg0: i32) -> (i32, i32, i32) {
    %c0_i32 = arith.constant 0 : i32
    %c0_i32_0 = arith.constant 0 : i32
    %c0_i32_1 = arith.constant 0 : i32
    return %c0_i32, %c0_i32_0, %arg0 : i32, i32, i32
  }
  func.func @transform_1(%arg0: i32) -> (i32, i32, i32, i32) {
    %c0_i32 = arith.constant 0 : i32
    %c0_i32_0 = arith.constant 0 : i32
    %c0_i32_1 = arith.constant 0 : i32
    %c0_i32_2 = arith.constant 0 : i32
    return %c0_i32, %c0_i32_0, %c0_i32_1, %arg0 : i32, i32, i32, i32
  }
  func.func @transform_2(%arg0: i32) -> (i32, i32, i32, i32) {
    %c0_i32 = arith.constant 0 : i32
    %c0_i32_0 = arith.constant 0 : i32
    %c0_i32_1 = arith.constant 0 : i32
    %c0_i32_2 = arith.constant 0 : i32
    return %c0_i32, %c0_i32_0, %c0_i32_1, %arg0 : i32, i32, i32, i32
  }
}

</mosaic_0001>

<llo_original>
// kernel: tpu_custom_call.1
$region0: #{tpu_custom_call.1}
  #allocation0 [shape = 'u32[]', space=smem, size = 0x4, offset = 0x4, fixed_abs, tag = 'smem constant byte address 0x4 - core index']
  #allocation1 [shape = 'u32[144,128]{1,0:T(1,128)}', space=vmem, size = 0x12000, scoped, tag = 'internal scratch']
  %s0 = inlined_call_operand.vmem [shape: f32[16,16,2], index: 0, kind: input, shape index: {}]
  %s1 = inlined_call_operand.vmem [shape: f32[4,13,13,2], index: 1, kind: output, shape index: {0}]
  %s2 = inlined_call_operand.vmem [shape: f32[4,13,13,2], index: 2, kind: output, shape index: {1}]
  %3 = xla_tuple %s1, %s2
  %s4 = sld [smem:[#allocation0]]
  $region22: #{tpu_custom_call.1} parent=0
    _
  %s6 = ssub.s32 1, %s4
  %s7 = scalar_select 0, %s6, %s4
  // Predicated region
  $region2: #{tpu_custom_call.1} parent=0 // pred_check
    _
  $region3: #{tpu_custom_call.1} parent=0 // pred_check_branch
    %9 = sbr.rel (0) target = $region5
  $region4: #{tpu_custom_call.1} parent=0 // pred_region
    _
  $region5: #{tpu_custom_call.1} parent=0 // pred_fallthru
    _
  %v10 = vld [vmem:[%s0] sm:$0xff]
  %v11 = vld [vmem:[%s0 + $0x8] sm:$0xff]
  %v12 = vld [vmem:[%s0 + $0x10] sm:$0xff]
  %v13 = vld [vmem:[%s0 + $0x18] sm:$0xff]
  %v14 = vld [vmem:[%s0 + $0x20] sm:$0xff]
  %v15 = vld [vmem:[%s0 + $0x28] sm:$0xff]
  %v16 = vld [vmem:[%s0 + $0x30] sm:$0xff]
  %v17 = vld [vmem:[%s0 + $0x38] sm:$0xff]
  %v18 = vld [vmem:[%s0 + $0x40] sm:$0xff]
  %v19 = vld [vmem:[%s0 + $0x48] sm:$0xff]
  %v20 = vld [vmem:[%s0 + $0x50] sm:$0xff]
  %v21 = vld [vmem:[%s0 + $0x58] sm:$0xff]
  %v22 = vld [vmem:[%s0 + $0x60] sm:$0xff]
  %v23 = vld [vmem:[%s0 + $0x68] sm:$0xff]
  %v24 = vld [vmem:[%s0 + $0x70] sm:$0xff]
  %v25 = vld [vmem:[%s0 + $0x78] sm:$0xff]
  %v26 = vld [vmem:[%s0 + $0x80] sm:$0xff]
  %v27 = vld [vmem:[%s0 + $0x88] sm:$0xff]
  %v28 = vld [vmem:[%s0 + $0x90] sm:$0xff]
  %v29 = vld [vmem:[%s0 + $0x98] sm:$0xff]
  %v30 = vld [vmem:[%s0 + $0xa0] sm:$0xff]
  %v31 = vld [vmem:[%s0 + $0xa8] sm:$0xff]
  %v32 = vld [vmem:[%s0 + $0xb0] sm:$0xff]
  %v33 = vld [vmem:[%s0 + $0xb8] sm:$0xff]
  %v34 = vld [vmem:[%s0 + $0xc0] sm:$0xff]
  %v35 = vld [vmem:[%s0 + $0xc8] sm:$0xff]
  %v36 = vld [vmem:[%s0 + $0xd0] sm:$0xff]
  %v37 = vld [vmem:[%s0 + $0xd8] sm:$0xff]
  %v38 = vld [vmem:[%s0 + $0xe0] sm:$0xff]
  %v39 = vld [vmem:[%s0 + $0xe8] sm:$0xff]
  %v40 = vld [vmem:[%s0 + $0xf0] sm:$0xff]
  %v41 = vld [vmem:[%s0 + $0xf8] sm:$0xff]
  %v42 = vsub.f32 0.0, %v10
  %v43 = vsub.f32 0.0, %v11
  %v44 = vsub.f32 0.0, %v12
  %v45 = vsub.f32 0.0, %v13
  %v46 = vsub.f32 0.0, %v14
  %v47 = vsub.f32 0.0, %v15
  %v48 = vsub.f32 0.0, %v16
  %v49 = vsub.f32 0.0, %v17
  %v50 = vsub.f32 0.0, %v18
  %v51 = vsub.f32 0.0, %v19
  %v52 = vsub.f32 0.0, %v20
  %v53 = vsub.f32 0.0, %v21
  %v54 = vsub.f32 0.0, %v22
  %v55 = vsub.f32 0.0, %v23
  %v56 = vsub.f32 0.0, %v24
  %v57 = vsub.f32 0.0, %v25
  %v58 = vsub.f32 0.0, %v26
  %v59 = vsub.f32 0.0, %v27
  %v60 = vsub.f32 0.0, %v28
  %v61 = vsub.f32 0.0, %v29
  %v62 = vsub.f32 0.0, %v30
  %v63 = vsub.f32 0.0, %v31
  %v64 = vsub.f32 0.0, %v32
  %v65 = vsub.f32 0.0, %v33
  %v66 = vsub.f32 0.0, %v34
  %v67 = vsub.f32 0.0, %v35
  %vm94 = vcmask 1046528
  %v95 = vrot.slane %v10, 1
  %v96 = vrot.slane %v11, 1
  %v97 = vsel %vm94, %v95, %v96
  %v98 = vrot.slane %v12, 1
  %v99 = vrot.slane %v13, 1
  %v100 = vsel %vm94, %v98, %v99
  %v101 = vrot.slane %v14, 1
  %v102 = vrot.slane %v15, 1
  %v103 = vsel %vm94, %v101, %v102
  %v104 = vrot.slane %v16, 1
  %v105 = vrot.slane %v17, 1
  %v106 = vsel %vm94, %v104, %v105
  %v107 = vrot.slane %v18, 1
  %v108 = vrot.slane %v19, 1
  %v109 = vsel %vm94, %v107, %v108
  %v110 = vrot.slane %v20, 1
  %v111 = vrot.slane %v21, 1
  %v112 = vsel %vm94, %v110, %v111
  %v113 = vrot.slane %v22, 1
  %v114 = vrot.slane %v23, 1
  %v115 = vsel %vm94, %v113, %v114
  %v116 = vrot.slane %v24, 1
  %v117 = vrot.slane %v25, 1
  %v118 = vsel %vm94, %v116, %v117
  %v119 = vrot.slane %v26, 1
  %v120 = vrot.slane %v27, 1
  %v121 = vsel %vm94, %v119, %v120
  %v122 = vrot.slane %v28, 1
  %v123 = vrot.slane %v29, 1
  %v124 = vsel %vm94, %v122, %v123
  %v125 = vrot.slane %v30, 1
  %v126 = vrot.slane %v31, 1
  %v127 = vsel %vm94, %v125, %v126
  %v128 = vrot.slane %v32, 1
  %v129 = vrot.slane %v33, 1
  %v130 = vsel %vm94, %v128, %v129
  %v131 = vrot.slane %v34, 1
  %v132 = vrot.slane %v35, 1
  %v133 = vsel %vm94, %v131, %v132
  %v160 = vsub.f32 %v42, %v97
  %v161 = vsub.f32 %v43, %v96
  %v162 = vsub.f32 %v44, %v100
  %v163 = vsub.f32 %v45, %v99
  %v164 = vsub.f32 %v46, %v103
  %v165 = vsub.f32 %v47, %v102
  %v166 = vsub.f32 %v48, %v106
  %v167 = vsub.f32 %v49, %v105
  %v168 = vsub.f32 %v50, %v109
  %v169 = vsub.f32 %v51, %v108
  %v170 = vsub.f32 %v52, %v112
  %v171 = vsub.f32 %v53, %v111
  %v172 = vsub.f32 %v54, %v115
  %v173 = vsub.f32 %v55, %v114
  %v174 = vsub.f32 %v56, %v118
  %v175 = vsub.f32 %v57, %v117
  %v176 = vsub.f32 %v58, %v121
  %v177 = vsub.f32 %v59, %v120
  %v178 = vsub.f32 %v60, %v124
  %v179 = vsub.f32 %v61, %v123
  %v180 = vsub.f32 %v62, %v127
  %v181 = vsub.f32 %v63, %v126
  %v182 = vsub.f32 %v64, %v130
  %v183 = vsub.f32 %v65, %v129
  %v184 = vsub.f32 %v66, %v133
  %v185 = vsub.f32 %v67, %v132
  %vm186 = vcmask 1045504
  %v187 = vrot.slane %v10, 2
  %v188 = vrot.slane %v11, 2
  %v189 = vsel %vm186, %v187, %v188
  %v190 = vrot.slane %v12, 2
  %v191 = vrot.slane %v13, 2
  %v192 = vsel %vm186, %v190, %v191
  %v193 = vrot.slane %v14, 2
  %v194 = vrot.slane %v15, 2
  %v195 = vsel %vm186, %v193, %v194
  %v196 = vrot.slane %v16, 2
  %v197 = vrot.slane %v17, 2
  %v198 = vsel %vm186, %v196, %v197
  %v199 = vrot.slane %v18, 2
  %v200 = vrot.slane %v19, 2
  %v201 = vsel %vm186, %v199, %v200
  %v202 = vrot.slane %v20, 2
  %v203 = vrot.slane %v21, 2
  %v204 = vsel %vm186, %v202, %v203
  %v205 = vrot.slane %v22, 2
  %v206 = vrot.slane %v23, 2
  %v207 = vsel %vm186, %v205, %v206
  %v208 = vrot.slane %v24, 2
  %v209 = vrot.slane %v25, 2
  %v210 = vsel %vm186, %v208, %v209
  %v211 = vrot.slane %v26, 2
  %v212 = vrot.slane %v27, 2
  %v213 = vsel %vm186, %v211, %v212
  %v214 = vrot.slane %v28, 2
  %v215 = vrot.slane %v29, 2
  %v216 = vsel %vm186, %v214, %v215
  %v217 = vrot.slane %v30, 2
  %v218 = vrot.slane %v31, 2
  %v219 = vsel %vm186, %v217, %v218
  %v220 = vrot.slane %v32, 2
  %v221 = vrot.slane %v33, 2
  %v222 = vsel %vm186, %v220, %v221
  %v223 = vrot.slane %v34, 2
  %v224 = vrot.slane %v35, 2
  %v225 = vsel %vm186, %v223, %v224
  %v252 = vadd.f32 %v160, %v189
  %v253 = vadd.f32 %v161, %v188
  %v254 = vadd.f32 %v162, %v192
  %v255 = vadd.f32 %v163, %v191
  %v256 = vadd.f32 %v164, %v195
  %v257 = vadd.f32 %v165, %v194
  %v258 = vadd.f32 %v166, %v198
  %v259 = vadd.f32 %v167, %v197
  %v260 = vadd.f32 %v168, %v201
  %v261 = vadd.f32 %v169, %v200
  %v262 = vadd.f32 %v170, %v204
  %v263 = vadd.f32 %v171, %v203
  %v264 = vadd.f32 %v172, %v207
  %v265 = vadd.f32 %v173, %v206
  %v266 = vadd.f32 %v174, %v210
  %v267 = vadd.f32 %v175, %v209
  %v268 = vadd.f32 %v176, %v213
  %v269 = vadd.f32 %v177, %v212
  %v270 = vadd.f32 %v178, %v216
  %v271 = vadd.f32 %v179, %v215
  %v272 = vadd.f32 %v180, %v219
  %v273 = vadd.f32 %v181, %v218
  %v274 = vadd.f32 %v182, %v222
  %v275 = vadd.f32 %v183, %v221
  %v276 = vadd.f32 %v184, %v225
  %v277 = vadd.f32 %v185, %v224
  %vm278 = vcmask 1044480
  %v279 = vrot.slane %v10, 3
  %v280 = vrot.slane %v11, 3
  %v281 = vsel %vm278, %v279, %v280
  %v282 = vrot.slane %v12, 3
  %v283 = vrot.slane %v13, 3
  %v284 = vsel %vm278, %v282, %v283
  %v285 = vrot.slane %v14, 3
  %v286 = vrot.slane %v15, 3
  %v287 = vsel %vm278, %v285, %v286
  %v288 = vrot.slane %v16, 3
  %v289 = vrot.slane %v17, 3
  %v290 = vsel %vm278, %v288, %v289
  %v291 = vrot.slane %v18, 3
  %v292 = vrot.slane %v19, 3
  %v293 = vsel %vm278, %v291, %v292
  %v294 = vrot.slane %v20, 3
  %v295 = vrot.slane %v21, 3
  %v296 = vsel %vm278, %v294, %v295
  %v297 = vrot.slane %v22, 3
  %v298 = vrot.slane %v23, 3
  %v299 = vsel %vm278, %v297, %v298
  %v300 = vrot.slane %v24, 3
  %v301 = vrot.slane %v25, 3
  %v302 = vsel %vm278, %v300, %v301
  %v303 = vrot.slane %v26, 3
  %v304 = vrot.slane %v27, 3
  %v305 = vsel %vm278, %v303, %v304
  %v306 = vrot.slane %v28, 3
  %v307 = vrot.slane %v29, 3
  %v308 = vsel %vm278, %v306, %v307
  %v309 = vrot.slane %v30, 3
  %v310 = vrot.slane %v31, 3
  %v311 = vsel %vm278, %v309, %v310
  %v312 = vrot.slane %v32, 3
  %v313 = vrot.slane %v33, 3
  %v314 = vsel %vm278, %v312, %v313
  %v315 = vrot.slane %v34, 3
  %v316 = vrot.slane %v35, 3
  %v317 = vsel %vm278, %v315, %v316
  %v344 = vadd.f32 %v252, %v281
  %v345 = vadd.f32 %v253, %v280
  %v346 = vadd.f32 %v254, %v284
  %v347 = vadd.f32 %v255, %v283
  %v348 = vadd.f32 %v256, %v287
  %v349 = vadd.f32 %v257, %v286
  %v350 = vadd.f32 %v258, %v290
  %v351 = vadd.f32 %v259, %v289
  %v352 = vadd.f32 %v260, %v293
  %v353 = vadd.f32 %v261, %v292
  %v354 = vadd.f32 %v262, %v296
  %v355 = vadd.f32 %v263, %v295
  %v356 = vadd.f32 %v264, %v299
  %v357 = vadd.f32 %v265, %v298
  %v358 = vadd.f32 %v266, %v302
  %v359 = vadd.f32 %v267, %v301
  %v360 = vadd.f32 %v268, %v305
  %v361 = vadd.f32 %v269, %v304
  %v362 = vadd.f32 %v270, %v308
  %v363 = vadd.f32 %v271, %v307
  %v364 = vadd.f32 %v272, %v311
  %v365 = vadd.f32 %v273, %v310
  %v366 = vadd.f32 %v274, %v314
  %v367 = vadd.f32 %v275, %v313
  %v368 = vadd.f32 %v276, %v317
  %v369 = vadd.f32 %v277, %v316
  %v370 = vsub.f32 %v344, %v12
  %v371 = vsub.f32 %v345, %v13
  %v372 = vsub.f32 %v346, %v14
  %v373 = vsub.f32 %v347, %v15
  %v374 = vsub.f32 %v348, %v16
  %v375 = vsub.f32 %v349, %v17
  %v376 = vsub.f32 %v350, %v18
  %v377 = vsub.f32 %v351, %v19
  %v378 = vsub.f32 %v352, %v20
  %v379 = vsub.f32 %v353, %v21
  %v380 = vsub.f32 %v354, %v22
  %v381 = vsub.f32 %v355, %v23
  %v382 = vsub.f32 %v356, %v24
  %v383 = vsub.f32 %v357, %v25
  %v384 = vsub.f32 %v358, %v26
  %v385 = vsub.f32 %v359, %v27
  %v386 = vsub.f32 %v360, %v28
  %v387 = vsub.f32 %v361, %v29
  %v388 = vsub.f32 %v362, %v30
  %v389 = vsub.f32 %v363, %v31
  %v390 = vsub.f32 %v364, %v32
  %v391 = vsub.f32 %v365, %v33
  %v392 = vsub.f32 %v366, %v34
  %v393 = vsub.f32 %v367, %v35
  %v394 = vsub.f32 %v368, %v36
  %v395 = vsub.f32 %v369, %v37
  %v398 = vrot.slane %v36, 1
  %v399 = vrot.slane %v37, 1
  %v400 = vsel %vm94, %v398, %v399
  %v403 = vsub.f32 %v370, %v100
  %v404 = vsub.f32 %v371, %v99
  %v405 = vsub.f32 %v372, %v103
  %v406 = vsub.f32 %v373, %v102
  %v407 = vsub.f32 %v374, %v106
  %v408 = vsub.f32 %v375, %v105
  %v409 = vsub.f32 %v376, %v109
  %v410 = vsub.f32 %v377, %v108
  %v411 = vsub.f32 %v378, %v112
  %v412 = vsub.f32 %v379, %v111
  %v413 = vsub.f32 %v380, %v115
  %v414 = vsub.f32 %v381, %v114
  %v415 = vsub.f32 %v382, %v118
  %v416 = vsub.f32 %v383, %v117
  %v417 = vsub.f32 %v384, %v121
  %v418 = vsub.f32 %v385, %v120
  %v419 = vsub.f32 %v386, %v124
  %v420 = vsub.f32 %v387, %v123
  %v421 = vsub.f32 %v388, %v127
  %v422 = vsub.f32 %v389, %v126
  %v423 = vsub.f32 %v390, %v130
  %v424 = vsub.f32 %v391, %v129
  %v425 = vsub.f32 %v392, %v133
  %v426 = vsub.f32 %v393, %v132
  %v427 = vsub.f32 %v394, %v400
  %v428 = vsub.f32 %v395, %v399
  %v429 = vrot.slane %v36, 2
  %v430 = vrot.slane %v37, 2
  %v431 = vsel %vm186, %v429, %v430
  %v434 = vadd.f32 %v403, %v192
  %v435 = vadd.f32 %v404, %v191
  %v436 = vadd.f32 %v405, %v195
  %v437 = vadd.f32 %v406, %v194
  %v438 = vadd.f32 %v407, %v198
  %v439 = vadd.f32 %v408, %v197
  %v440 = vadd.f32 %v409, %v201
  %v441 = vadd.f32 %v410, %v200
  %v442 = vadd.f32 %v411, %v204
  %v443 = vadd.f32 %v412, %v203
  %v444 = vadd.f32 %v413, %v207
  %v445 = vadd.f32 %v414, %v206
  %v446 = vadd.f32 %v415, %v210
  %v447 = vadd.f32 %v416, %v209
  %v448 = vadd.f32 %v417, %v213
  %v449 = vadd.f32 %v418, %v212
  %v450 = vadd.f32 %v419, %v216
  %v451 = vadd.f32 %v420, %v215
  %v452 = vadd.f32 %v421, %v219
  %v453 = vadd.f32 %v422, %v218
  %v454 = vadd.f32 %v423, %v222
  %v455 = vadd.f32 %v424, %v221
  %v456 = vadd.f32 %v425, %v225
  %v457 = vadd.f32 %v426, %v224
  %v458 = vadd.f32 %v427, %v431
  %v459 = vadd.f32 %v428, %v430
  %v460 = vrot.slane %v36, 3
  %v461 = vrot.slane %v37, 3
  %v462 = vsel %vm278, %v460, %v461
  %v465 = vadd.f32 %v434, %v284
  %v466 = vadd.f32 %v435, %v283
  %v467 = vadd.f32 %v436, %v287
  %v468 = vadd.f32 %v437, %v286
  %v469 = vadd.f32 %v438, %v290
  %v470 = vadd.f32 %v439, %v289
  %v471 = vadd.f32 %v440, %v293
  %v472 = vadd.f32 %v441, %v292
  %v473 = vadd.f32 %v442, %v296
  %v474 = vadd.f32 %v443, %v295
  %v475 = vadd.f32 %v444, %v299
  %v476 = vadd.f32 %v445, %v298
  %v477 = vadd.f32 %v446, %v302
  %v478 = vadd.f32 %v447, %v301
  %v479 = vadd.f32 %v448, %v305
  %v480 = vadd.f32 %v449, %v304
  %v481 = vadd.f32 %v450, %v308
  %v482 = vadd.f32 %v451, %v307
  %v483 = vadd.f32 %v452, %v311
  %v484 = vadd.f32 %v453, %v310
  %v485 = vadd.f32 %v454, %v314
  %v486 = vadd.f32 %v455, %v313
  %v487 = vadd.f32 %v456, %v317
  %v488 = vadd.f32 %v457, %v316
  %v489 = vadd.f32 %v458, %v462
  %v490 = vadd.f32 %v459, %v461
  %v491 = vsub.f32 %v465, %v14
  %v492 = vsub.f32 %v466, %v15
  %v493 = vsub.f32 %v467, %v16
  %v494 = vsub.f32 %v468, %v17
  %v495 = vsub.f32 %v469, %v18
  %v496 = vsub.f32 %v470, %v19
  %v497 = vsub.f32 %v471, %v20
  %v498 = vsub.f32 %v472, %v21
  %v499 = vsub.f32 %v473, %v22
  %v500 = vsub.f32 %v474, %v23
  %v501 = vsub.f32 %v475, %v24
  %v502 = vsub.f32 %v476, %v25
  %v503 = vsub.f32 %v477, %v26
  %v504 = vsub.f32 %v478, %v27
  %v505 = vsub.f32 %v479, %v28
  %v506 = vsub.f32 %v480, %v29
  %v507 = vsub.f32 %v481, %v30
  %v508 = vsub.f32 %v482, %v31
  %v509 = vsub.f32 %v483, %v32
  %v510 = vsub.f32 %v484, %v33
  %v511 = vsub.f32 %v485, %v34
  %v512 = vsub.f32 %v486, %v35
  %v513 = vsub.f32 %v487, %v36
  %v514 = vsub.f32 %v488, %v37
  %v515 = vsub.f32 %v489, %v38
  %v516 = vsub.f32 %v490, %v39
  %v519 = vrot.slane %v38, 1
  %v520 = vrot.slane %v39, 1
  %v521 = vsel %vm94, %v519, %v520
  %v524 = vsub.f32 %v491, %v103
  %v525 = vsub.f32 %v492, %v102
  %v526 = vsub.f32 %v493, %v106
  %v527 = vsub.f32 %v494, %v105
  %v528 = vsub.f32 %v495, %v109
  %v529 = vsub.f32 %v496, %v108
  %v530 = vsub.f32 %v497, %v112
  %v531 = vsub.f32 %v498, %v111
  %v532 = vsub.f32 %v499, %v115
  %v533 = vsub.f32 %v500, %v114
  %v534 = vsub.f32 %v501, %v118
  %v535 = vsub.f32 %v502, %v117
  %v536 = vsub.f32 %v503, %v121
  %v537 = vsub.f32 %v504, %v120
  %v538 = vsub.f32 %v505, %v124
  %v539 = vsub.f32 %v506, %v123
  %v540 = vsub.f32 %v507, %v127
  %v541 = vsub.f32 %v508, %v126
  %v542 = vsub.f32 %v509, %v130
  %v543 = vsub.f32 %v510, %v129
  %v544 = vsub.f32 %v511, %v133
  %v545 = vsub.f32 %v512, %v132
  %v546 = vsub.f32 %v513, %v400
  %v547 = vsub.f32 %v514, %v399
  %v548 = vsub.f32 %v515, %v521
  %v549 = vsub.f32 %v516, %v520
  %v550 = vrot.slane %v38, 2
  %v551 = vrot.slane %v39, 2
  %v552 = vsel %vm186, %v550, %v551
  %v555 = vadd.f32 %v524, %v195
  %v556 = vadd.f32 %v525, %v194
  %v557 = vadd.f32 %v526, %v198
  %v558 = vadd.f32 %v527, %v197
  %v559 = vadd.f32 %v528, %v201
  %v560 = vadd.f32 %v529, %v200
  %v561 = vadd.f32 %v530, %v204
  %v562 = vadd.f32 %v531, %v203
  %v563 = vadd.f32 %v532, %v207
  %v564 = vadd.f32 %v533, %v206
  %v565 = vadd.f32 %v534, %v210
  %v566 = vadd.f32 %v535, %v209
  %v567 = vadd.f32 %v536, %v213
  %v568 = vadd.f32 %v537, %v212
  %v569 = vadd.f32 %v538, %v216
  %v570 = vadd.f32 %v539, %v215
  %v571 = vadd.f32 %v540, %v219
  %v572 = vadd.f32 %v541, %v218
  %v573 = vadd.f32 %v542, %v222
  %v574 = vadd.f32 %v543, %v221
  %v575 = vadd.f32 %v544, %v225
  %v576 = vadd.f32 %v545, %v224
  %v577 = vadd.f32 %v546, %v431
  %v578 = vadd.f32 %v547, %v430
  %v579 = vadd.f32 %v548, %v552
  %v580 = vadd.f32 %v549, %v551
  %v581 = vrot.slane %v38, 3
  %v582 = vrot.slane %v39, 3
  %v583 = vsel %vm278, %v581, %v582
  %v586 = vadd.f32 %v555, %v287
  %v587 = vadd.f32 %v556, %v286
  %v588 = vadd.f32 %v557, %v290
  %v589 = vadd.f32 %v558, %v289
  %v590 = vadd.f32 %v559, %v293
  %v591 = vadd.f32 %v560, %v292
  %v592 = vadd.f32 %v561, %v296
  %v593 = vadd.f32 %v562, %v295
  %v594 = vadd.f32 %v563, %v299
  %v595 = vadd.f32 %v564, %v298
  %v596 = vadd.f32 %v565, %v302
  %v597 = vadd.f32 %v566, %v301
  %v598 = vadd.f32 %v567, %v305
  %v599 = vadd.f32 %v568, %v304
  %v600 = vadd.f32 %v569, %v308
  %v601 = vadd.f32 %v570, %v307
  %v602 = vadd.f32 %v571, %v311
  %v603 = vadd.f32 %v572, %v310
  %v604 = vadd.f32 %v573, %v314
  %v605 = vadd.f32 %v574, %v313
  %v606 = vadd.f32 %v575, %v317
  %v607 = vadd.f32 %v576, %v316
  %v608 = vadd.f32 %v577, %v462
  %v609 = vadd.f32 %v578, %v461
  %v610 = vadd.f32 %v579, %v583
  %v611 = vadd.f32 %v580, %v582
  %v612 = vsub.f32 %v586, %v16
  %v613 = vsub.f32 %v587, %v17
  %v614 = vsub.f32 %v588, %v18
  %v615 = vsub.f32 %v589, %v19
  %v616 = vsub.f32 %v590, %v20
  %v617 = vsub.f32 %v591, %v21
  %v618 = vsub.f32 %v592, %v22
  %v619 = vsub.f32 %v593, %v23
  %v620 = vsub.f32 %v594, %v24
  %v621 = vsub.f32 %v595, %v25
  %v622 = vsub.f32 %v596, %v26
  %v623 = vsub.f32 %v597, %v27
  %v624 = vsub.f32 %v598, %v28
  %v625 = vsub.f32 %v599, %v29
  %v626 = vsub.f32 %v600, %v30
  %v627 = vsub.f32 %v601, %v31
  %v628 = vsub.f32 %v602, %v32
  %v629 = vsub.f32 %v603, %v33
  %v630 = vsub.f32 %v604, %v34
  %v631 = vsub.f32 %v605, %v35
  %v632 = vsub.f32 %v606, %v36
  %v633 = vsub.f32 %v607, %v37
  %v634 = vsub.f32 %v608, %v38
  %v635 = vsub.f32 %v609, %v39
  %v636 = vsub.f32 %v610, %v40
  %v637 = vsub.f32 %v611, %v41
  %v640 = vrot.slane %v40, 1
  %v641 = vrot.slane %v41, 1
  %v642 = vsel %vm94, %v640, %v641
  %v645 = vsub.f32 %v612, %v106
  %v646 = vsub.f32 %v613, %v105
  %v647 = vsub.f32 %v614, %v109
  %v648 = vsub.f32 %v615, %v108
  %v649 = vsub.f32 %v616, %v112
  %v650 = vsub.f32 %v617, %v111
  %v651 = vsub.f32 %v618, %v115
  %v652 = vsub.f32 %v619, %v114
  %v653 = vsub.f32 %v620, %v118
  %v654 = vsub.f32 %v621, %v117
  %v655 = vsub.f32 %v622, %v121
  %v656 = vsub.f32 %v623, %v120
  %v657 = vsub.f32 %v624, %v124
  %v658 = vsub.f32 %v625, %v123
  %v659 = vsub.f32 %v626, %v127
  %v660 = vsub.f32 %v627, %v126
  %v661 = vsub.f32 %v628, %v130
  %v662 = vsub.f32 %v629, %v129
  %v663 = vsub.f32 %v630, %v133
  %v664 = vsub.f32 %v631, %v132
  %v665 = vsub.f32 %v632, %v400
  %v666 = vsub.f32 %v633, %v399
  %v667 = vsub.f32 %v634, %v521
  %v668 = vsub.f32 %v635, %v520
  %v669 = vsub.f32 %v636, %v642
  %v670 = vsub.f32 %v637, %v641
  %v671 = vrot.slane %v40, 2
  %v672 = vrot.slane %v41, 2
  %v673 = vsel %vm186, %v671, %v672
  %v676 = vadd.f32 %v645, %v198
  %v677 = vadd.f32 %v646, %v197
  %v678 = vadd.f32 %v647, %v201
  %v679 = vadd.f32 %v648, %v200
  %v680 = vadd.f32 %v649, %v204
  %v681 = vadd.f32 %v650, %v203
  %v682 = vadd.f32 %v651, %v207
  %v683 = vadd.f32 %v652, %v206
  %v684 = vadd.f32 %v653, %v210
  %v685 = vadd.f32 %v654, %v209
  %v686 = vadd.f32 %v655, %v213
  %v687 = vadd.f32 %v656, %v212
  %v688 = vadd.f32 %v657, %v216
  %v689 = vadd.f32 %v658, %v215
  %v690 = vadd.f32 %v659, %v219
  %v691 = vadd.f32 %v660, %v218
  %v692 = vadd.f32 %v661, %v222
  %v693 = vadd.f32 %v662, %v221
  %v694 = vadd.f32 %v663, %v225
  %v695 = vadd.f32 %v664, %v224
  %v696 = vadd.f32 %v665, %v431
  %v697 = vadd.f32 %v666, %v430
  %v698 = vadd.f32 %v667, %v552
  %v699 = vadd.f32 %v668, %v551
  %v700 = vadd.f32 %v669, %v673
  %v701 = vadd.f32 %v670, %v672
  %v702 = vrot.slane %v40, 3
  %v703 = vrot.slane %v41, 3
  %v704 = vsel %vm278, %v702, %v703
  %v707 = vadd.f32 %v676, %v290
  %v708 = vadd.f32 %v677, %v289
  %v709 = vadd.f32 %v678, %v293
  %v710 = vadd.f32 %v679, %v292
  %v711 = vadd.f32 %v680, %v296
  %v712 = vadd.f32 %v681, %v295
  %v713 = vadd.f32 %v682, %v299
  %v714 = vadd.f32 %v683, %v298
  %v715 = vadd.f32 %v684, %v302
  %v716 = vadd.f32 %v685, %v301
  %v717 = vadd.f32 %v686, %v305
  %v718 = vadd.f32 %v687, %v304
  %v719 = vadd.f32 %v688, %v308
  %v720 = vadd.f32 %v689, %v307
  %v721 = vadd.f32 %v690, %v311
  %v722 = vadd.f32 %v691, %v310
  %v723 = vadd.f32 %v692, %v314
  %v724 = vadd.f32 %v693, %v313
  %v725 = vadd.f32 %v694, %v317
  %v726 = vadd.f32 %v695, %v316
  %v727 = vadd.f32 %v696, %v462
  %v728 = vadd.f32 %v697, %v461
  %v729 = vadd.f32 %v698, %v583
  %v730 = vadd.f32 %v699, %v582
  %v731 = vadd.f32 %v700, %v704
  %v732 = vadd.f32 %v701, %v703
  %vm733 = vcmask 15360
  %734 = vst.msk [vmem:[%s1] sm:$0xff] %vm733, %v707
  %vm735 = vcmask 12288
  %736 = vst.msk [vmem:[%s1 + $0x8] sm:$0x1f] %vm735, %v708
  %737 = vst.msk [vmem:[%s1 + $0x10] sm:$0xff] %vm733, %v709
  %738 = vst.msk [vmem:[%s1 + $0x18] sm:$0x1f] %vm735, %v710
  %739 = vst.msk [vmem:[%s1 + $0x20] sm:$0xff] %vm733, %v711
  %740 = vst.msk [vmem:[%s1 + $0x28] sm:$0x1f] %vm735, %v712
  %741 = vst.msk [vmem:[%s1 + $0x30] sm:$0xff] %vm733, %v713
  %742 = vst.msk [vmem:[%s1 + $0x38] sm:$0x1f] %vm735, %v714
  %743 = vst.msk [vmem:[%s1 + $0x40] sm:$0xff] %vm733, %v715
  %744 = vst.msk [vmem:[%s1 + $0x48] sm:$0x1f] %vm735, %v716
  %745 = vst.msk [vmem:[%s1 + $0x50] sm:$0xff] %vm733, %v717
  %746 = vst.msk [vmem:[%s1 + $0x58] sm:$0x1f] %vm735, %v718
  %747 = vst.msk [vmem:[%s1 + $0x60] sm:$0xff] %vm733, %v719
  %748 = vst.msk [vmem:[%s1 + $0x68] sm:$0x1f] %vm735, %v720
  %749 = vst.msk [vmem:[%s1 + $0x70] sm:$0xff] %vm733, %v721
  %750 = vst.msk [vmem:[%s1 + $0x78] sm:$0x1f] %vm735, %v722
  %751 = vst.msk [vmem:[%s1 + $0x80] sm:$0xff] %vm733, %v723
  %752 = vst.msk [vmem:[%s1 + $0x88] sm:$0x1f] %vm735, %v724
  %753 = vst.msk [vmem:[%s1 + $0x90] sm:$0xff] %vm733, %v725
  %754 = vst.msk [vmem:[%s1 + $0x98] sm:$0x1f] %vm735, %v726
  %755 = vst.msk [vmem:[%s1 + $0xa0] sm:$0xff] %vm733, %v727
  %756 = vst.msk [vmem:[%s1 + $0xa8] sm:$0x1f] %vm735, %v728
  %757 = vst.msk [vmem:[%s1 + $0xb0] sm:$0xff] %vm733, %v729
  %758 = vst.msk [vmem:[%s1 + $0xb8] sm:$0x1f] %vm735, %v730
  %759 = vst.msk [vmem:[%s1 + $0xc0] sm:$0xff] %vm733, %v731
  %760 = vst.msk [vmem:[%s1 + $0xc8] sm:$0x1f] %vm735, %v732
  %v761 = vmax.f32 %v707, 0.0
  %v762 = vmax.f32 %v708, 0.0
  %v763 = vmax.f32 %v709, 0.0
  %v764 = vmax.f32 %v710, 0.0
  %v765 = vmax.f32 %v711, 0.0
  %v766 = vmax.f32 %v712, 0.0
  %v767 = vmax.f32 %v713, 0.0
  %v768 = vmax.f32 %v714, 0.0
  %v769 = vmax.f32 %v715, 0.0
  %v770 = vmax.f32 %v716, 0.0
  %v771 = vmax.f32 %v717, 0.0
  %v772 = vmax.f32 %v718, 0.0
  %v773 = vmax.f32 %v719, 0.0
  %v774 = vmax.f32 %v720, 0.0
  %v775 = vmax.f32 %v721, 0.0
  %v776 = vmax.f32 %v722, 0.0
  %v777 = vmax.f32 %v723, 0.0
  %v778 = vmax.f32 %v724, 0.0
  %v779 = vmax.f32 %v725, 0.0
  %v780 = vmax.f32 %v726, 0.0
  %v781 = vmax.f32 %v727, 0.0
  %v782 = vmax.f32 %v728, 0.0
  %v783 = vmax.f32 %v729, 0.0
  %v784 = vmax.f32 %v730, 0.0
  %v785 = vmax.f32 %v731, 0.0
  %v786 = vmax.f32 %v732, 0.0
  %787 = vst.msk [vmem:[%s2] sm:$0xff] %vm733, %v761
  %788 = vst.msk [vmem:[%s2 + $0x8] sm:$0x1f] %vm735, %v762
  %789 = vst.msk [vmem:[%s2 + $0x10] sm:$0xff] %vm733, %v763
  %790 = vst.msk [vmem:[%s2 + $0x18] sm:$0x1f] %vm735, %v764
  %791 = vst.msk [vmem:[%s2 + $0x20] sm:$0xff] %vm733, %v765
  %792 = vst.msk [vmem:[%s2 + $0x28] sm:$0x1f] %vm735, %v766
  %793 = vst.msk [vmem:[%s2 + $0x30] sm:$0xff] %vm733, %v767
  %794 = vst.msk [vmem:[%s2 + $0x38] sm:$0x1f] %vm735, %v768
  %795 = vst.msk [vmem:[%s2 + $0x40] sm:$0xff] %vm733, %v769
  %796 = vst.msk [vmem:[%s2 + $0x48] sm:$0x1f] %vm735, %v770
  %797 = vst.msk [vmem:[%s2 + $0x50] sm:$0xff] %vm733, %v771
  %798 = vst.msk [vmem:[%s2 + $0x58] sm:$0x1f] %vm735, %v772
  %799 = vst.msk [vmem:[%s2 + $0x60] sm:$0xff] %vm733, %v773
  %800 = vst.msk [vmem:[%s2 + $0x68] sm:$0x1f] %vm735, %v774
  %801 = vst.msk [vmem:[%s2 + $0x70] sm:$0xff] %vm733, %v775
  %802 = vst.msk [vmem:[%s2 + $0x78] sm:$0x1f] %vm735, %v776
  %803 = vst.msk [vmem:[%s2 + $0x80] sm:$0xff] %vm733, %v777
  %804 = vst.msk [vmem:[%s2 + $0x88] sm:$0x1f] %vm735, %v778
  %805 = vst.msk [vmem:[%s2 + $0x90] sm:$0xff] %vm733, %v779
  %806 = vst.msk [vmem:[%s2 + $0x98] sm:$0x1f] %vm735, %v780
  %807 = vst.msk [vmem:[%s2 + $0xa0] sm:$0xff] %vm733, %v781
  %808 = vst.msk [vmem:[%s2 + $0xa8] sm:$0x1f] %vm735, %v782
  %809 = vst.msk [vmem:[%s2 + $0xb0] sm:$0xff] %vm733, %v783
  %810 = vst.msk [vmem:[%s2 + $0xb8] sm:$0x1f] %vm735, %v784
  %811 = vst.msk [vmem:[%s2 + $0xc0] sm:$0xff] %vm733, %v785
  %812 = vst.msk [vmem:[%s2 + $0xc8] sm:$0x1f] %vm735, %v786
  %v813 = vadd.f32 %v10, %v97
  %v814 = vadd.f32 %v11, %v96
  %v815 = vadd.f32 %v12, %v100
  %v816 = vadd.f32 %v13, %v99
  %v817 = vadd.f32 %v14, %v103
  %v818 = vadd.f32 %v15, %v102
  %v819 = vadd.f32 %v16, %v106
  %v820 = vadd.f32 %v17, %v105
  %v821 = vadd.f32 %v18, %v109
  %v822 = vadd.f32 %v19, %v108
  %v823 = vadd.f32 %v20, %v112
  %v824 = vadd.f32 %v21, %v111
  %v825 = vadd.f32 %v22, %v115
  %v826 = vadd.f32 %v23, %v114
  %v827 = vadd.f32 %v24, %v118
  %v828 = vadd.f32 %v25, %v117
  %v829 = vadd.f32 %v26, %v121
  %v830 = vadd.f32 %v27, %v120
  %v831 = vadd.f32 %v28, %v124
  %v832 = vadd.f32 %v29, %v123
  %v833 = vadd.f32 %v30, %v127
  %v834 = vadd.f32 %v31, %v126
  %v835 = vadd.f32 %v32, %v130
  %v836 = vadd.f32 %v33, %v129
  %v837 = vadd.f32 %v34, %v133
  %v838 = vadd.f32 %v35, %v132
  %v839 = vsub.f32 %v813, %v189
  %v840 = vsub.f32 %v814, %v188
  %v841 = vsub.f32 %v815, %v192
  %v842 = vsub.f32 %v816, %v191
  %v843 = vsub.f32 %v817, %v195
  %v844 = vsub.f32 %v818, %v194
  %v845 = vsub.f32 %v819, %v198
  %v846 = vsub.f32 %v820, %v197
  %v847 = vsub.f32 %v821, %v201
  %v848 = vsub.f32 %v822, %v200
  %v849 = vsub.f32 %v823, %v204
  %v850 = vsub.f32 %v824, %v203
  %v851 = vsub.f32 %v825, %v207
  %v852 = vsub.f32 %v826, %v206
  %v853 = vsub.f32 %v827, %v210
  %v854 = vsub.f32 %v828, %v209
  %v855 = vsub.f32 %v829, %v213
  %v856 = vsub.f32 %v830, %v212
  %v857 = vsub.f32 %v831, %v216
  %v858 = vsub.f32 %v832, %v215
  %v859 = vsub.f32 %v833, %v219
  %v860 = vsub.f32 %v834, %v218
  %v861 = vsub.f32 %v835, %v222
  %v862 = vsub.f32 %v836, %v221
  %v863 = vsub.f32 %v837, %v225
  %v864 = vsub.f32 %v838, %v224
  %v865 = vsub.f32 %v839, %v281
  %v866 = vsub.f32 %v840, %v280
  %v867 = vsub.f32 %v841, %v284
  %v868 = vsub.f32 %v842, %v283
  %v869 = vsub.f32 %v843, %v287
  %v870 = vsub.f32 %v844, %v286
  %v871 = vsub.f32 %v845, %v290
  %v872 = vsub.f32 %v846, %v289
  %v873 = vsub.f32 %v847, %v293
  %v874 = vsub.f32 %v848, %v292
  %v875 = vsub.f32 %v849, %v296
  %v876 = vsub.f32 %v850, %v295
  %v877 = vsub.f32 %v851, %v299
  %v878 = vsub.f32 %v852, %v298
  %v879 = vsub.f32 %v853, %v302
  %v880 = vsub.f32 %v854, %v301
  %v881 = vsub.f32 %v855, %v305
  %v882 = vsub.f32 %v856, %v304
  %v883 = vsub.f32 %v857, %v308
  %v884 = vsub.f32 %v858, %v307
  %v885 = vsub.f32 %v859, %v311
  %v886 = vsub.f32 %v860, %v310
  %v887 = vsub.f32 %v861, %v314
  %v888 = vsub.f32 %v862, %v313
  %v889 = vsub.f32 %v863, %v317
  %v890 = vsub.f32 %v864, %v316
  %v891 = vadd.f32 %v865, %v12
  %v892 = vadd.f32 %v866, %v13
  %v893 = vadd.f32 %v867, %v14
  %v894 = vadd.f32 %v868, %v15
  %v895 = vadd.f32 %v869, %v16
  %v896 = vadd.f32 %v870, %v17
  %v897 = vadd.f32 %v871, %v18
  %v898 = vadd.f32 %v872, %v19
  %v899 = vadd.f32 %v873, %v20
  %v900 = vadd.f32 %v874, %v21
  %v901 = vadd.f32 %v875, %v22
  %v902 = vadd.f32 %v876, %v23
  %v903 = vadd.f32 %v877, %v24
  %v904 = vadd.f32 %v878, %v25
  %v905 = vadd.f32 %v879, %v26
  %v906 = vadd.f32 %v880, %v27
  %v907 = vadd.f32 %v881, %v28
  %v908 = vadd.f32 %v882, %v29
  %v909 = vadd.f32 %v883, %v30
  %v910 = vadd.f32 %v884, %v31
  %v911 = vadd.f32 %v885, %v32
  %v912 = vadd.f32 %v886, %v33
  %v913 = vadd.f32 %v887, %v34
  %v914 = vadd.f32 %v888, %v35
  %v915 = vadd.f32 %v889, %v36
  %v916 = vadd.f32 %v890, %v37
  %v917 = vadd.f32 %v891, %v100
  %v918 = vadd.f32 %v892, %v99
  %v919 = vadd.f32 %v893, %v103
  %v920 = vadd.f32 %v894, %v102
  %v921 = vadd.f32 %v895, %v106
  %v922 = vadd.f32 %v896, %v105
  %v923 = vadd.f32 %v897, %v109
  %v924 = vadd.f32 %v898, %v108
  %v925 = vadd.f32 %v899, %v112
  %v926 = vadd.f32 %v900, %v111
  %v927 = vadd.f32 %v901, %v115
  %v928 = vadd.f32 %v902, %v114
  %v929 = vadd.f32 %v903, %v118
  %v930 = vadd.f32 %v904, %v117
  %v931 = vadd.f32 %v905, %v121
  %v932 = vadd.f32 %v906, %v120
  %v933 = vadd.f32 %v907, %v124
  %v934 = vadd.f32 %v908, %v123
  %v935 = vadd.f32 %v909, %v127
  %v936 = vadd.f32 %v910, %v126
  %v937 = vadd.f32 %v911, %v130
  %v938 = vadd.f32 %v912, %v129
  %v939 = vadd.f32 %v913, %v133
  %v940 = vadd.f32 %v914, %v132
  %v941 = vadd.f32 %v915, %v400
  %v942 = vadd.f32 %v916, %v399
  %v943 = vsub.f32 %v917, %v192
  %v944 = vsub.f32 %v918, %v191
  %v945 = vsub.f32 %v919, %v195
  %v946 = vsub.f32 %v920, %v194
  %v947 = vsub.f32 %v921, %v198
  %v948 = vsub.f32 %v922, %v197
  %v949 = vsub.f32 %v923, %v201
  %v950 = vsub.f32 %v924, %v200
  %v951 = vsub.f32 %v925, %v204
  %v952 = vsub.f32 %v926, %v203
  %v953 = vsub.f32 %v927, %v207
  %v954 = vsub.f32 %v928, %v206
  %v955 = vsub.f32 %v929, %v210
  %v956 = vsub.f32 %v930, %v209
  %v957 = vsub.f32 %v931, %v213
  %v958 = vsub.f32 %v932, %v212
  %v959 = vsub.f32 %v933, %v216
  %v960 = vsub.f32 %v934, %v215
  %v961 = vsub.f32 %v935, %v219
  %v962 = vsub.f32 %v936, %v218
  %v963 = vsub.f32 %v937, %v222
  %v964 = vsub.f32 %v938, %v221
  %v965 = vsub.f32 %v939, %v225
  %v966 = vsub.f32 %v940, %v224
  %v967 = vsub.f32 %v941, %v431
  %v968 = vsub.f32 %v942, %v430
  %v969 = vsub.f32 %v943, %v284
  %v970 = vsub.f32 %v944, %v283
  %v971 = vsub.f32 %v945, %v287
  %v972 = vsub.f32 %v946, %v286
  %v973 = vsub.f32 %v947, %v290
  %v974 = vsub.f32 %v948, %v289
  %v975 = vsub.f32 %v949, %v293
  %v976 = vsub.f32 %v950, %v292
  %v977 = vsub.f32 %v951, %v296
  %v978 = vsub.f32 %v952, %v295
  %v979 = vsub.f32 %v953, %v299
  %v980 = vsub.f32 %v954, %v298
  %v981 = vsub.f32 %v955, %v302
  %v982 = vsub.f32 %v956, %v301
  %v983 = vsub.f32 %v957, %v305
  %v984 = vsub.f32 %v958, %v304
  %v985 = vsub.f32 %v959, %v308
  %v986 = vsub.f32 %v960, %v307
  %v987 = vsub.f32 %v961, %v311
  %v988 = vsub.f32 %v962, %v310
  %v989 = vsub.f32 %v963, %v314
  %v990 = vsub.f32 %v964, %v313
  %v991 = vsub.f32 %v965, %v317
  %v992 = vsub.f32 %v966, %v316
  %v993 = vsub.f32 %v967, %v462
  %v994 = vsub.f32 %v968, %v461
  %v995 = vadd.f32 %v969, %v14
  %v996 = vadd.f32 %v970, %v15
  %v997 = vadd.f32 %v971, %v16
  %v998 = vadd.f32 %v972, %v17
  %v999 = vadd.f32 %v973, %v18
  %v1000 = vadd.f32 %v974, %v19
  %v1001 = vadd.f32 %v975, %v20
  %v1002 = vadd.f32 %v976, %v21
  %v1003 = vadd.f32 %v977, %v22
  %v1004 = vadd.f32 %v978, %v23
  %v1005 = vadd.f32 %v979, %v24
  %v1006 = vadd.f32 %v980, %v25
  %v1007 = vadd.f32 %v981, %v26
  %v1008 = vadd.f32 %v982, %v27
  %v1009 = vadd.f32 %v983, %v28
  %v1010 = vadd.f32 %v984, %v29
  %v1011 = vadd.f32 %v985, %v30
  %v1012 = vadd.f32 %v986, %v31
  %v1013 = vadd.f32 %v987, %v32
  %v1014 = vadd.f32 %v988, %v33
  %v1015 = vadd.f32 %v989, %v34
  %v1016 = vadd.f32 %v990, %v35
  %v1017 = vadd.f32 %v991, %v36
  %v1018 = vadd.f32 %v992, %v37
  %v1019 = vadd.f32 %v993, %v38
  %v1020 = vadd.f32 %v994, %v39
  %v1021 = vadd.f32 %v995, %v103
  %v1022 = vadd.f32 %v996, %v102
  %v1023 = vadd.f32 %v997, %v106
  %v1024 = vadd.f32 %v998, %v105
  %v1025 = vadd.f32 %v999, %v109
  %v1026 = vadd.f32 %v1000, %v108
  %v1027 = vadd.f32 %v1001, %v112
  %v1028 = vadd.f32 %v1002, %v111
  %v1029 = vadd.f32 %v1003, %v115
  %v1030 = vadd.f32 %v1004, %v114
  %v1031 = vadd.f32 %v1005, %v118
  %v1032 = vadd.f32 %v1006, %v117
  %v1033 = vadd.f32 %v1007, %v121
  %v1034 = vadd.f32 %v1008, %v120
  %v1035 = vadd.f32 %v1009, %v124
  %v1036 = vadd.f32 %v1010, %v123
  %v1037 = vadd.f32 %v1011, %v127
  %v1038 = vadd.f32 %v1012, %v126
  %v1039 = vadd.f32 %v1013, %v130
  %v1040 = vadd.f32 %v1014, %v129
  %v1041 = vadd.f32 %v1015, %v133
  %v1042 = vadd.f32 %v1016, %v132
  %v1043 = vadd.f32 %v1017, %v400
  %v1044 = vadd.f32 %v1018, %v399
  %v1045 = vadd.f32 %v1019, %v521
  %v1046 = vadd.f32 %v1020, %v520
  %v1047 = vsub.f32 %v1021, %v195
  %v1048 = vsub.f32 %v1022, %v194
  %v1049 = vsub.f32 %v1023, %v198
  %v1050 = vsub.f32 %v1024, %v197
  %v1051 = vsub.f32 %v1025, %v201
  %v1052 = vsub.f32 %v1026, %v200
  %v1053 = vsub.f32 %v1027, %v204
  %v1054 = vsub.f32 %v1028, %v203
  %v1055 = vsub.f32 %v1029, %v207
  %v1056 = vsub.f32 %v1030, %v206
  %v1057 = vsub.f32 %v1031, %v210
  %v1058 = vsub.f32 %v1032, %v209
  %v1059 = vsub.f32 %v1033, %v213
  %v1060 = vsub.f32 %v1034, %v212
  %v1061 = vsub.f32 %v1035, %v216
  %v1062 = vsub.f32 %v1036, %v215
  %v1063 = vsub.f32 %v1037, %v219
  %v1064 = vsub.f32 %v1038, %v218
  %v1065 = vsub.f32 %v1039, %v222
  %v1066 = vsub.f32 %v1040, %v221
  %v1067 = vsub.f32 %v1041, %v225
  %v1068 = vsub.f32 %v1042, %v224
  %v1069 = vsub.f32 %v1043, %v431
  %v1070 = vsub.f32 %v1044, %v430
  %v1071 = vsub.f32 %v1045, %v552
  %v1072 = vsub.f32 %v1046, %v551
  %v1073 = vsub.f32 %v1047, %v287
  %v1074 = vsub.f32 %v1048, %v286
  %v1075 = vsub.f32 %v1049, %v290
  %v1076 = vsub.f32 %v1050, %v289
  %v1077 = vsub.f32 %v1051, %v293
  %v1078 = vsub.f32 %v1052, %v292
  %v1079 = vsub.f32 %v1053, %v296
  %v1080 = vsub.f32 %v1054, %v295
  %v1081 = vsub.f32 %v1055, %v299
  %v1082 = vsub.f32 %v1056, %v298
  %v1083 = vsub.f32 %v1057, %v302
  %v1084 = vsub.f32 %v1058, %v301
  %v1085 = vsub.f32 %v1059, %v305
  %v1086 = vsub.f32 %v1060, %v304
  %v1087 = vsub.f32 %v1061, %v308
  %v1088 = vsub.f32 %v1062, %v307
  %v1089 = vsub.f32 %v1063, %v311
  %v1090 = vsub.f32 %v1064, %v310
  %v1091 = vsub.f32 %v1065, %v314
  %v1092 = vsub.f32 %v1066, %v313
  %v1093 = vsub.f32 %v1067, %v317
  %v1094 = vsub.f32 %v1068, %v316
  %v1095 = vsub.f32 %v1069, %v462
  %v1096 = vsub.f32 %v1070, %v461
  %v1097 = vsub.f32 %v1071, %v583
  %v1098 = vsub.f32 %v1072, %v582
  %v1099 = vadd.f32 %v1073, %v16
  %v1100 = vadd.f32 %v1074, %v17
  %v1101 = vadd.f32 %v1075, %v18
  %v1102 = vadd.f32 %v1076, %v19
  %v1103 = vadd.f32 %v1077, %v20
  %v1104 = vadd.f32 %v1078, %v21
  %v1105 = vadd.f32 %v1079, %v22
  %v1106 = vadd.f32 %v1080, %v23
  %v1107 = vadd.f32 %v1081, %v24
  %v1108 = vadd.f32 %v1082, %v25
  %v1109 = vadd.f32 %v1083, %v26
  %v1110 = vadd.f32 %v1084, %v27
  %v1111 = vadd.f32 %v1085, %v28
  %v1112 = vadd.f32 %v1086, %v29
  %v1113 = vadd.f32 %v1087, %v30
  %v1114 = vadd.f32 %v1088, %v31
  %v1115 = vadd.f32 %v1089, %v32
  %v1116 = vadd.f32 %v1090, %v33
  %v1117 = vadd.f32 %v1091, %v34
  %v1118 = vadd.f32 %v1092, %v35
  %v1119 = vadd.f32 %v1093, %v36
  %v1120 = vadd.f32 %v1094, %v37
  %v1121 = vadd.f32 %v1095, %v38
  %v1122 = vadd.f32 %v1096, %v39
  %v1123 = vadd.f32 %v1097, %v40
  %v1124 = vadd.f32 %v1098, %v41
  %v1125 = vadd.f32 %v1099, %v106
  %v1126 = vadd.f32 %v1100, %v105
  %v1127 = vadd.f32 %v1101, %v109
  %v1128 = vadd.f32 %v1102, %v108
  %v1129 = vadd.f32 %v1103, %v112
  %v1130 = vadd.f32 %v1104, %v111
  %v1131 = vadd.f32 %v1105, %v115
  %v1132 = vadd.f32 %v1106, %v114
  %v1133 = vadd.f32 %v1107, %v118
  %v1134 = vadd.f32 %v1108, %v117
  %v1135 = vadd.f32 %v1109, %v121
  %v1136 = vadd.f32 %v1110, %v120
  %v1137 = vadd.f32 %v1111, %v124
  %v1138 = vadd.f32 %v1112, %v123
  %v1139 = vadd.f32 %v1113, %v127
  %v1140 = vadd.f32 %v1114, %v126
  %v1141 = vadd.f32 %v1115, %v130
  %v1142 = vadd.f32 %v1116, %v129
  %v1143 = vadd.f32 %v1117, %v133
  %v1144 = vadd.f32 %v1118, %v132
  %v1145 = vadd.f32 %v1119, %v400
  %v1146 = vadd.f32 %v1120, %v399
  %v1147 = vadd.f32 %v1121, %v521
  %v1148 = vadd.f32 %v1122, %v520
  %v1149 = vadd.f32 %v1123, %v642
  %v1150 = vadd.f32 %v1124, %v641
  %v1151 = vsub.f32 %v1125, %v198
  %v1152 = vsub.f32 %v1126, %v197
  %v1153 = vsub.f32 %v1127, %v201
  %v1154 = vsub.f32 %v1128, %v200
  %v1155 = vsub.f32 %v1129, %v204
  %v1156 = vsub.f32 %v1130, %v203
  %v1157 = vsub.f32 %v1131, %v207
  %v1158 = vsub.f32 %v1132, %v206
  %v1159 = vsub.f32 %v1133, %v210
  %v1160 = vsub.f32 %v1134, %v209
  %v1161 = vsub.f32 %v1135, %v213
  %v1162 = vsub.f32 %v1136, %v212
  %v1163 = vsub.f32 %v1137, %v216
  %v1164 = vsub.f32 %v1138, %v215
  %v1165 = vsub.f32 %v1139, %v219
  %v1166 = vsub.f32 %v1140, %v218
  %v1167 = vsub.f32 %v1141, %v222
  %v1168 = vsub.f32 %v1142, %v221
  %v1169 = vsub.f32 %v1143, %v225
  %v1170 = vsub.f32 %v1144, %v224
  %v1171 = vsub.f32 %v1145, %v431
  %v1172 = vsub.f32 %v1146, %v430
  %v1173 = vsub.f32 %v1147, %v552
  %v1174 = vsub.f32 %v1148, %v551
  %v1175 = vsub.f32 %v1149, %v673
  %v1176 = vsub.f32 %v1150, %v672
  %v1177 = vsub.f32 %v1151, %v290
  %v1178 = vsub.f32 %v1152, %v289
  %v1179 = vsub.f32 %v1153, %v293
  %v1180 = vsub.f32 %v1154, %v292
  %v1181 = vsub.f32 %v1155, %v296
  %v1182 = vsub.f32 %v1156, %v295
  %v1183 = vsub.f32 %v1157, %v299
  %v1184 = vsub.f32 %v1158, %v298
  %v1185 = vsub.f32 %v1159, %v302
  %v1186 = vsub.f32 %v1160, %v301
  %v1187 = vsub.f32 %v1161, %v305
  %v1188 = vsub.f32 %v1162, %v304
  %v1189 = vsub.f32 %v1163, %v308
  %v1190 = vsub.f32 %v1164, %v307
  %v1191 = vsub.f32 %v1165, %v311
  %v1192 = vsub.f32 %v1166, %v310
  %v1193 = vsub.f32 %v1167, %v314
  %v1194 = vsub.f32 %v1168, %v313
  %v1195 = vsub.f32 %v1169, %v317
  %v1196 = vsub.f32 %v1170, %v316
  %v1197 = vsub.f32 %v1171, %v462
  %v1198 = vsub.f32 %v1172, %v461
  %v1199 = vsub.f32 %v1173, %v583
  %v1200 = vsub.f32 %v1174, %v582
  %v1201 = vsub.f32 %v1175, %v704
  %v1202 = vsub.f32 %v1176, %v703
  %s1203 = scalar_lea.vmem %s1, 208
  %1204 = vst.msk [vmem:[%s1203] sm:$0xff] %vm733, %v1177
  %1205 = vst.msk [vmem:[%s1203 + $0x8] sm:$0x1f] %vm735, %v1178
  %1206 = vst.msk [vmem:[%s1203 + $0x10] sm:$0xff] %vm733, %v1179
  %1207 = vst.msk [vmem:[%s1203 + $0x18] sm:$0x1f] %vm735, %v1180
  %1208 = vst.msk [vmem:[%s1203 + $0x20] sm:$0xff] %vm733, %v1181
  %1209 = vst.msk [vmem:[%s1203 + $0x28] sm:$0x1f] %vm735, %v1182
  %1210 = vst.msk [vmem:[%s1203 + $0x30] sm:$0xff] %vm733, %v1183
  %1211 = vst.msk [vmem:[%s1203 + $0x38] sm:$0x1f] %vm735, %v1184
  %1212 = vst.msk [vmem:[%s1203 + $0x40] sm:$0xff] %vm733, %v1185
  %1213 = vst.msk [vmem:[%s1203 + $0x48] sm:$0x1f] %vm735, %v1186
  %1214 = vst.msk [vmem:[%s1203 + $0x50] sm:$0xff] %vm733, %v1187
  %1215 = vst.msk [vmem:[%s1203 + $0x58] sm:$0x1f] %vm735, %v1188
  %1216 = vst.msk [vmem:[%s1203 + $0x60] sm:$0xff] %vm733, %v1189
  %1217 = vst.msk [vmem:[%s1203 + $0x68] sm:$0x1f] %vm735, %v1190
  %1218 = vst.msk [vmem:[%s1203 + $0x70] sm:$0xff] %vm733, %v1191
  %1219 = vst.msk [vmem:[%s1203 + $0x78] sm:$0x1f] %vm735, %v1192
  %1220 = vst.msk [vmem:[%s1203 + $0x80] sm:$0xff] %vm733, %v1193
  %1221 = vst.msk [vmem:[%s1203 + $0x88] sm:$0x1f] %vm735, %v1194
  %1222 = vst.msk [vmem:[%s1203 + $0x90] sm:$0xff] %vm733, %v1195
  %1223 = vst.msk [vmem:[%s1203 + $0x98] sm:$0x1f] %vm735, %v1196
  %1224 = vst.msk [vmem:[%s1203 + $0xa0] sm:$0xff] %vm733, %v1197
  %1225 = vst.msk [vmem:[%s1203 + $0xa8] sm:$0x1f] %vm735, %v1198
  %1226 = vst.msk [vmem:[%s1203 + $0xb0] sm:$0xff] %vm733, %v1199
  %1227 = vst.msk [vmem:[%s1203 + $0xb8] sm:$0x1f] %vm735, %v1200
  %1228 = vst.msk [vmem:[%s1203 + $0xc0] sm:$0xff] %vm733, %v1201
  %1229 = vst.msk [vmem:[%s1203 + $0xc8] sm:$0x1f] %vm735, %v1202
  %v1230 = vmax.f32 %v1177, 0.0
  %v1231 = vmax.f32 %v1178, 0.0
  %v1232 = vmax.f32 %v1179, 0.0
  %v1233 = vmax.f32 %v1180, 0.0
  %v1234 = vmax.f32 %v1181, 0.0
  %v1235 = vmax.f32 %v1182, 0.0
  %v1236 = vmax.f32 %v1183, 0.0
  %v1237 = vmax.f32 %v1184, 0.0
  %v1238 = vmax.f32 %v1185, 0.0
  %v1239 = vmax.f32 %v1186, 0.0
  %v1240 = vmax.f32 %v1187, 0.0
  %v1241 = vmax.f32 %v1188, 0.0
  %v1242 = vmax.f32 %v1189, 0.0
  %v1243 = vmax.f32 %v1190, 0.0
  %v1244 = vmax.f32 %v1191, 0.0
  %v1245 = vmax.f32 %v1192, 0.0
  %v1246 = vmax.f32 %v1193, 0.0
  %v1247 = vmax.f32 %v1194, 0.0
  %v1248 = vmax.f32 %v1195, 0.0
  %v1249 = vmax.f32 %v1196, 0.0
  %v1250 = vmax.f32 %v1197, 0.0
  %v1251 = vmax.f32 %v1198, 0.0
  %v1252 = vmax.f32 %v1199, 0.0
  %v1253 = vmax.f32 %v1200, 0.0
  %v1254 = vmax.f32 %v1201, 0.0
  %v1255 = vmax.f32 %v1202, 0.0
  %s1256 = scalar_lea.vmem %s2, 208
  %1257 = vst.msk [vmem:[%s1256] sm:$0xff] %vm733, %v1230
  %1258 = vst.msk [vmem:[%s1256 + $0x8] sm:$0x1f] %vm735, %v1231
  %1259 = vst.msk [vmem:[%s1256 + $0x10] sm:$0xff] %vm733, %v1232
  %1260 = vst.msk [vmem:[%s1256 + $0x18] sm:$0x1f] %vm735, %v1233
  %1261 = vst.msk [vmem:[%s1256 + $0x20] sm:$0xff] %vm733, %v1234
  %1262 = vst.msk [vmem:[%s1256 + $0x28] sm:$0x1f] %vm735, %v1235
  %1263 = vst.msk [vmem:[%s1256 + $0x30] sm:$0xff] %vm733, %v1236
  %1264 = vst.msk [vmem:[%s1256 + $0x38] sm:$0x1f] %vm735, %v1237
  %1265 = vst.msk [vmem:[%s1256 + $0x40] sm:$0xff] %vm733, %v1238
  %1266 = vst.msk [vmem:[%s1256 + $0x48] sm:$0x1f] %vm735, %v1239
  %1267 = vst.msk [vmem:[%s1256 + $0x50] sm:$0xff] %vm733, %v1240
  %1268 = vst.msk [vmem:[%s1256 + $0x58] sm:$0x1f] %vm735, %v1241
  %1269 = vst.msk [vmem:[%s1256 + $0x60] sm:$0xff] %vm733, %v1242
  %1270 = vst.msk [vmem:[%s1256 + $0x68] sm:$0x1f] %vm735, %v1243
  %1271 = vst.msk [vmem:[%s1256 + $0x70] sm:$0xff] %vm733, %v1244
  %1272 = vst.msk [vmem:[%s1256 + $0x78] sm:$0x1f] %vm735, %v1245
  %1273 = vst.msk [vmem:[%s1256 + $0x80] sm:$0xff] %vm733, %v1246
  %1274 = vst.msk [vmem:[%s1256 + $0x88] sm:$0x1f] %vm735, %v1247
  %1275 = vst.msk [vmem:[%s1256 + $0x90] sm:$0xff] %vm733, %v1248
  %1276 = vst.msk [vmem:[%s1256 + $0x98] sm:$0x1f] %vm735, %v1249
  %1277 = vst.msk [vmem:[%s1256 + $0xa0] sm:$0xff] %vm733, %v1250
  %1278 = vst.msk [vmem:[%s1256 + $0xa8] sm:$0x1f] %vm735, %v1251
  %1279 = vst.msk [vmem:[%s1256 + $0xb0] sm:$0xff] %vm733, %v1252
  %1280 = vst.msk [vmem:[%s1256 + $0xb8] sm:$0x1f] %vm735, %v1253
  %1281 = vst.msk [vmem:[%s1256 + $0xc0] sm:$0xff] %vm733, %v1254
  %1282 = vst.msk [vmem:[%s1256 + $0xc8] sm:$0x1f] %vm735, %v1255
  %v1283 = vsub.f32 %v160, %v189
  %v1284 = vsub.f32 %v161, %v188
  %v1285 = vsub.f32 %v162, %v192
  %v1286 = vsub.f32 %v163, %v191
  %v1287 = vsub.f32 %v164, %v195
  %v1288 = vsub.f32 %v165, %v194
  %v1289 = vsub.f32 %v166, %v198
  %v1290 = vsub.f32 %v167, %v197
  %v1291 = vsub.f32 %v168, %v201
  %v1292 = vsub.f32 %v169, %v200
  %v1293 = vsub.f32 %v170, %v204
  %v1294 = vsub.f32 %v171, %v203
  %v1295 = vsub.f32 %v172, %v207
  %v1296 = vsub.f32 %v173, %v206
  %v1297 = vsub.f32 %v174, %v210
  %v1298 = vsub.f32 %v175, %v209
  %v1299 = vsub.f32 %v176, %v213
  %v1300 = vsub.f32 %v177, %v212
  %v1301 = vsub.f32 %v178, %v216
  %v1302 = vsub.f32 %v179, %v215
  %v1303 = vsub.f32 %v180, %v219
  %v1304 = vsub.f32 %v181, %v218
  %v1305 = vsub.f32 %v182, %v222
  %v1306 = vsub.f32 %v183, %v221
  %v1307 = vsub.f32 %v184, %v225
  %v1308 = vsub.f32 %v185, %v224
  %v1309 = vsub.f32 %v1283, %v281
  %v1310 = vsub.f32 %v1284, %v280
  %v1311 = vsub.f32 %v1285, %v284
  %v1312 = vsub.f32 %v1286, %v283
  %v1313 = vsub.f32 %v1287, %v287
  %v1314 = vsub.f32 %v1288, %v286
  %v1315 = vsub.f32 %v1289, %v290
  %v1316 = vsub.f32 %v1290, %v289
  %v1317 = vsub.f32 %v1291, %v293
  %v1318 = vsub.f32 %v1292, %v292
  %v1319 = vsub.f32 %v1293, %v296
  %v1320 = vsub.f32 %v1294, %v295
  %v1321 = vsub.f32 %v1295, %v299
  %v1322 = vsub.f32 %v1296, %v298
  %v1323 = vsub.f32 %v1297, %v302
  %v1324 = vsub.f32 %v1298, %v301
  %v1325 = vsub.f32 %v1299, %v305
  %v1326 = vsub.f32 %v1300, %v304
  %v1327 = vsub.f32 %v1301, %v308
  %v1328 = vsub.f32 %v1302, %v307
  %v1329 = vsub.f32 %v1303, %v311
  %v1330 = vsub.f32 %v1304, %v310
  %v1331 = vsub.f32 %v1305, %v314
  %v1332 = vsub.f32 %v1306, %v313
  %v1333 = vsub.f32 %v1307, %v317
  %v1334 = vsub.f32 %v1308, %v316
  %v1335 = vsub.f32 %v1309, %v12
  %v1336 = vsub.f32 %v1310, %v13
  %v1337 = vsub.f32 %v1311, %v14
  %v1338 = vsub.f32 %v1312, %v15
  %v1339 = vsub.f32 %v1313, %v16
  %v1340 = vsub.f32 %v1314, %v17
  %v1341 = vsub.f32 %v1315, %v18
  %v1342 = vsub.f32 %v1316, %v19
  %v1343 = vsub.f32 %v1317, %v20
  %v1344 = vsub.f32 %v1318, %v21
  %v1345 = vsub.f32 %v1319, %v22
  %v1346 = vsub.f32 %v1320, %v23
  %v1347 = vsub.f32 %v1321, %v24
  %v1348 = vsub.f32 %v1322, %v25
  %v1349 = vsub.f32 %v1323, %v26
  %v1350 = vsub.f32 %v1324, %v27
  %v1351 = vsub.f32 %v1325, %v28
  %v1352 = vsub.f32 %v1326, %v29
  %v1353 = vsub.f32 %v1327, %v30
  %v1354 = vsub.f32 %v1328, %v31
  %v1355 = vsub.f32 %v1329, %v32
  %v1356 = vsub.f32 %v1330, %v33
  %v1357 = vsub.f32 %v1331, %v34
  %v1358 = vsub.f32 %v1332, %v35
  %v1359 = vsub.f32 %v1333, %v36
  %v1360 = vsub.f32 %v1334, %v37
  %v1361 = vsub.f32 %v1335, %v100
  %v1362 = vsub.f32 %v1336, %v99
  %v1363 = vsub.f32 %v1337, %v103
  %v1364 = vsub.f32 %v1338, %v102
  %v1365 = vsub.f32 %v1339, %v106
  %v1366 = vsub.f32 %v1340, %v105
  %v1367 = vsub.f32 %v1341, %v109
  %v1368 = vsub.f32 %v1342, %v108
  %v1369 = vsub.f32 %v1343, %v112
  %v1370 = vsub.f32 %v1344, %v111
  %v1371 = vsub.f32 %v1345, %v115
  %v1372 = vsub.f32 %v1346, %v114
  %v1373 = vsub.f32 %v1347, %v118
  %v1374 = vsub.f32 %v1348, %v117
  %v1375 = vsub.f32 %v1349, %v121
  %v1376 = vsub.f32 %v1350, %v120
  %v1377 = vsub.f32 %v1351, %v124
  %v1378 = vsub.f32 %v1352, %v123
  %v1379 = vsub.f32 %v1353, %v127
  %v1380 = vsub.f32 %v1354, %v126
  %v1381 = vsub.f32 %v1355, %v130
  %v1382 = vsub.f32 %v1356, %v129
  %v1383 = vsub.f32 %v1357, %v133
  %v1384 = vsub.f32 %v1358, %v132
  %v1385 = vsub.f32 %v1359, %v400
  %v1386 = vsub.f32 %v1360, %v399
  %v1387 = vsub.f32 %v1361, %v192
  %v1388 = vsub.f32 %v1362, %v191
  %v1389 = vsub.f32 %v1363, %v195
  %v1390 = vsub.f32 %v1364, %v194
  %v1391 = vsub.f32 %v1365, %v198
  %v1392 = vsub.f32 %v1366, %v197
  %v1393 = vsub.f32 %v1367, %v201
  %v1394 = vsub.f32 %v1368, %v200
  %v1395 = vsub.f32 %v1369, %v204
  %v1396 = vsub.f32 %v1370, %v203
  %v1397 = vsub.f32 %v1371, %v207
  %v1398 = vsub.f32 %v1372, %v206
  %v1399 = vsub.f32 %v1373, %v210
  %v1400 = vsub.f32 %v1374, %v209
  %v1401 = vsub.f32 %v1375, %v213
  %v1402 = vsub.f32 %v1376, %v212
  %v1403 = vsub.f32 %v1377, %v216
  %v1404 = vsub.f32 %v1378, %v215
  %v1405 = vsub.f32 %v1379, %v219
  %v1406 = vsub.f32 %v1380, %v218
  %v1407 = vsub.f32 %v1381, %v222
  %v1408 = vsub.f32 %v1382, %v221
  %v1409 = vsub.f32 %v1383, %v225
  %v1410 = vsub.f32 %v1384, %v224
  %v1411 = vsub.f32 %v1385, %v431
  %v1412 = vsub.f32 %v1386, %v430
  %v1413 = vsub.f32 %v1387, %v284
  %v1414 = vsub.f32 %v1388, %v283
  %v1415 = vsub.f32 %v1389, %v287
  %v1416 = vsub.f32 %v1390, %v286
  %v1417 = vsub.f32 %v1391, %v290
  %v1418 = vsub.f32 %v1392, %v289
  %v1419 = vsub.f32 %v1393, %v293
  %v1420 = vsub.f32 %v1394, %v292
  %v1421 = vsub.f32 %v1395, %v296
  %v1422 = vsub.f32 %v1396, %v295
  %v1423 = vsub.f32 %v1397, %v299
  %v1424 = vsub.f32 %v1398, %v298
  %v1425 = vsub.f32 %v1399, %v302
  %v1426 = vsub.f32 %v1400, %v301
  %v1427 = vsub.f32 %v1401, %v305
  %v1428 = vsub.f32 %v1402, %v304
  %v1429 = vsub.f32 %v1403, %v308
  %v1430 = vsub.f32 %v1404, %v307
  %v1431 = vsub.f32 %v1405, %v311
  %v1432 = vsub.f32 %v1406, %v310
  %v1433 = vsub.f32 %v1407, %v314
  %v1434 = vsub.f32 %v1408, %v313
  %v1435 = vsub.f32 %v1409, %v317
  %v1436 = vsub.f32 %v1410, %v316
  %v1437 = vsub.f32 %v1411, %v462
  %v1438 = vsub.f32 %v1412, %v461
  %v1439 = vadd.f32 %v1413, %v14
  %v1440 = vadd.f32 %v1414, %v15
  %v1441 = vadd.f32 %v1415, %v16
  %v1442 = vadd.f32 %v1416, %v17
  %v1443 = vadd.f32 %v1417, %v18
  %v1444 = vadd.f32 %v1418, %v19
  %v1445 = vadd.f32 %v1419, %v20
  %v1446 = vadd.f32 %v1420, %v21
  %v1447 = vadd.f32 %v1421, %v22
  %v1448 = vadd.f32 %v1422, %v23
  %v1449 = vadd.f32 %v1423, %v24
  %v1450 = vadd.f32 %v1424, %v25
  %v1451 = vadd.f32 %v1425, %v26
  %v1452 = vadd.f32 %v1426, %v27
  %v1453 = vadd.f32 %v1427, %v28
  %v1454 = vadd.f32 %v1428, %v29
  %v1455 = vadd.f32 %v1429, %v30
  %v1456 = vadd.f32 %v1430, %v31
  %v1457 = vadd.f32 %v1431, %v32
  %v1458 = vadd.f32 %v1432, %v33
  %v1459 = vadd.f32 %v1433, %v34
  %v1460 = vadd.f32 %v1434, %v35
  %v1461 = vadd.f32 %v1435, %v36
  %v1462 = vadd.f32 %v1436, %v37
  %v1463 = vadd.f32 %v1437, %v38
  %v1464 = vadd.f32 %v1438, %v39
  %v1465 = vadd.f32 %v1439, %v103
  %v1466 = vadd.f32 %v1440, %v102
  %v1467 = vadd.f32 %v1441, %v106
  %v1468 = vadd.f32 %v1442, %v105
  %v1469 = vadd.f32 %v1443, %v109
  %v1470 = vadd.f32 %v1444, %v108
  %v1471 = vadd.f32 %v1445, %v112
  %v1472 = vadd.f32 %v1446, %v111
  %v1473 = vadd.f32 %v1447, %v115
  %v1474 = vadd.f32 %v1448, %v114
  %v1475 = vadd.f32 %v1449, %v118
  %v1476 = vadd.f32 %v1450, %v117
  %v1477 = vadd.f32 %v1451, %v121
  %v1478 = vadd.f32 %v1452, %v120
  %v1479 = vadd.f32 %v1453, %v124
  %v1480 = vadd.f32 %v1454, %v123
  %v1481 = vadd.f32 %v1455, %v127
  %v1482 = vadd.f32 %v1456, %v126
  %v1483 = vadd.f32 %v1457, %v130
  %v1484 = vadd.f32 %v1458, %v129
  %v1485 = vadd.f32 %v1459, %v133
  %v1486 = vadd.f32 %v1460, %v132
  %v1487 = vadd.f32 %v1461, %v400
  %v1488 = vadd.f32 %v1462, %v399
  %v1489 = vadd.f32 %v1463, %v521
  %v1490 = vadd.f32 %v1464, %v520
  %v1491 = vadd.f32 %v1465, %v195
  %v1492 = vadd.f32 %v1466, %v194
  %v1493 = vadd.f32 %v1467, %v198
  %v1494 = vadd.f32 %v1468, %v197
  %v1495 = vadd.f32 %v1469, %v201
  %v1496 = vadd.f32 %v1470, %v200
  %v1497 = vadd.f32 %v1471, %v204
  %v1498 = vadd.f32 %v1472, %v203
  %v1499 = vadd.f32 %v1473, %v207
  %v1500 = vadd.f32 %v1474, %v206
  %v1501 = vadd.f32 %v1475, %v210
  %v1502 = vadd.f32 %v1476, %v209
  %v1503 = vadd.f32 %v1477, %v213
  %v1504 = vadd.f32 %v1478, %v212
  %v1505 = vadd.f32 %v1479, %v216
  %v1506 = vadd.f32 %v1480, %v215
  %v1507 = vadd.f32 %v1481, %v219
  %v1508 = vadd.f32 %v1482, %v218
  %v1509 = vadd.f32 %v1483, %v222
  %v1510 = vadd.f32 %v1484, %v221
  %v1511 = vadd.f32 %v1485, %v225
  %v1512 = vadd.f32 %v1486, %v224
  %v1513 = vadd.f32 %v1487, %v431
  %v1514 = vadd.f32 %v1488, %v430
  %v1515 = vadd.f32 %v1489, %v552
  %v1516 = vadd.f32 %v1490, %v551
  %v1517 = vadd.f32 %v1491, %v287
  %v1518 = vadd.f32 %v1492, %v286
  %v1519 = vadd.f32 %v1493, %v290
  %v1520 = vadd.f32 %v1494, %v289
  %v1521 = vadd.f32 %v1495, %v293
  %v1522 = vadd.f32 %v1496, %v292
  %v1523 = vadd.f32 %v1497, %v296
  %v1524 = vadd.f32 %v1498, %v295
  %v1525 = vadd.f32 %v1499, %v299
  %v1526 = vadd.f32 %v1500, %v298
  %v1527 = vadd.f32 %v1501, %v302
  %v1528 = vadd.f32 %v1502, %v301
  %v1529 = vadd.f32 %v1503, %v305
  %v1530 = vadd.f32 %v1504, %v304
  %v1531 = vadd.f32 %v1505, %v308
  %v1532 = vadd.f32 %v1506, %v307
  %v1533 = vadd.f32 %v1507, %v311
  %v1534 = vadd.f32 %v1508, %v310
  %v1535 = vadd.f32 %v1509, %v314
  %v1536 = vadd.f32 %v1510, %v313
  %v1537 = vadd.f32 %v1511, %v317
  %v1538 = vadd.f32 %v1512, %v316
  %v1539 = vadd.f32 %v1513, %v462
  %v1540 = vadd.f32 %v1514, %v461
  %v1541 = vadd.f32 %v1515, %v583
  %v1542 = vadd.f32 %v1516, %v582
  %v1543 = vadd.f32 %v1517, %v16
  %v1544 = vadd.f32 %v1518, %v17
  %v1545 = vadd.f32 %v1519, %v18
  %v1546 = vadd.f32 %v1520, %v19
  %v1547 = vadd.f32 %v1521, %v20
  %v1548 = vadd.f32 %v1522, %v21
  %v1549 = vadd.f32 %v1523, %v22
  %v1550 = vadd.f32 %v1524, %v23
  %v1551 = vadd.f32 %v1525, %v24
  %v1552 = vadd.f32 %v1526, %v25
  %v1553 = vadd.f32 %v1527, %v26
  %v1554 = vadd.f32 %v1528, %v27
  %v1555 = vadd.f32 %v1529, %v28
  %v1556 = vadd.f32 %v1530, %v29
  %v1557 = vadd.f32 %v1531, %v30
  %v1558 = vadd.f32 %v1532, %v31
  %v1559 = vadd.f32 %v1533, %v32
  %v1560 = vadd.f32 %v1534, %v33
  %v1561 = vadd.f32 %v1535, %v34
  %v1562 = vadd.f32 %v1536, %v35
  %v1563 = vadd.f32 %v1537, %v36
  %v1564 = vadd.f32 %v1538, %v37
  %v1565 = vadd.f32 %v1539, %v38
  %v1566 = vadd.f32 %v1540, %v39
  %v1567 = vadd.f32 %v1541, %v40
  %v1568 = vadd.f32 %v1542, %v41
  %v1569 = vadd.f32 %v1543, %v106
  %v1570 = vadd.f32 %v1544, %v105
  %v1571 = vadd.f32 %v1545, %v109
  %v1572 = vadd.f32 %v1546, %v108
  %v1573 = vadd.f32 %v1547, %v112
  %v1574 = vadd.f32 %v1548, %v111
  %v1575 = vadd.f32 %v1549, %v115
  %v1576 = vadd.f32 %v1550, %v114
  %v1577 = vadd.f32 %v1551, %v118
  %v1578 = vadd.f32 %v1552, %v117
  %v1579 = vadd.f32 %v1553, %v121
  %v1580 = vadd.f32 %v1554, %v120
  %v1581 = vadd.f32 %v1555, %v124
  %v1582 = vadd.f32 %v1556, %v123
  %v1583 = vadd.f32 %v1557, %v127
  %v1584 = vadd.f32 %v1558, %v126
  %v1585 = vadd.f32 %v1559, %v130
  %v1586 = vadd.f32 %v1560, %v129
  %v1587 = vadd.f32 %v1561, %v133
  %v1588 = vadd.f32 %v1562, %v132
  %v1589 = vadd.f32 %v1563, %v400
  %v1590 = vadd.f32 %v1564, %v399
  %v1591 = vadd.f32 %v1565, %v521
  %v1592 = vadd.f32 %v1566, %v520
  %v1593 = vadd.f32 %v1567, %v642
  %v1594 = vadd.f32 %v1568, %v641
  %v1595 = vadd.f32 %v1569, %v198
  %v1596 = vadd.f32 %v1570, %v197
  %v1597 = vadd.f32 %v1571, %v201
  %v1598 = vadd.f32 %v1572, %v200
  %v1599 = vadd.f32 %v1573, %v204
  %v1600 = vadd.f32 %v1574, %v203
  %v1601 = vadd.f32 %v1575, %v207
  %v1602 = vadd.f32 %v1576, %v206
  %v1603 = vadd.f32 %v1577, %v210
  %v1604 = vadd.f32 %v1578, %v209
  %v1605 = vadd.f32 %v1579, %v213
  %v1606 = vadd.f32 %v1580, %v212
  %v1607 = vadd.f32 %v1581, %v216
  %v1608 = vadd.f32 %v1582, %v215
  %v1609 = vadd.f32 %v1583, %v219
  %v1610 = vadd.f32 %v1584, %v218
  %v1611 = vadd.f32 %v1585, %v222
  %v1612 = vadd.f32 %v1586, %v221
  %v1613 = vadd.f32 %v1587, %v225
  %v1614 = vadd.f32 %v1588, %v224
  %v1615 = vadd.f32 %v1589, %v431
  %v1616 = vadd.f32 %v1590, %v430
  %v1617 = vadd.f32 %v1591, %v552
  %v1618 = vadd.f32 %v1592, %v551
  %v1619 = vadd.f32 %v1593, %v673
  %v1620 = vadd.f32 %v1594, %v672
  %v1621 = vadd.f32 %v1595, %v290
  %v1622 = vadd.f32 %v1596, %v289
  %v1623 = vadd.f32 %v1597, %v293
  %v1624 = vadd.f32 %v1598, %v292
  %v1625 = vadd.f32 %v1599, %v296
  %v1626 = vadd.f32 %v1600, %v295
  %v1627 = vadd.f32 %v1601, %v299
  %v1628 = vadd.f32 %v1602, %v298
  %v1629 = vadd.f32 %v1603, %v302
  %v1630 = vadd.f32 %v1604, %v301
  %v1631 = vadd.f32 %v1605, %v305
  %v1632 = vadd.f32 %v1606, %v304
  %v1633 = vadd.f32 %v1607, %v308
  %v1634 = vadd.f32 %v1608, %v307
  %v1635 = vadd.f32 %v1609, %v311
  %v1636 = vadd.f32 %v1610, %v310
  %v1637 = vadd.f32 %v1611, %v314
  %v1638 = vadd.f32 %v1612, %v313
  %v1639 = vadd.f32 %v1613, %v317
  %v1640 = vadd.f32 %v1614, %v316
  %v1641 = vadd.f32 %v1615, %v462
  %v1642 = vadd.f32 %v1616, %v461
  %v1643 = vadd.f32 %v1617, %v583
  %v1644 = vadd.f32 %v1618, %v582
  %v1645 = vadd.f32 %v1619, %v704
  %v1646 = vadd.f32 %v1620, %v703
  %s1647 = scalar_lea.vmem %s1, 416
  %1648 = vst.msk [vmem:[%s1647] sm:$0xff] %vm733, %v1621
  %1649 = vst.msk [vmem:[%s1647 + $0x8] sm:$0x1f] %vm735, %v1622
  %1650 = vst.msk [vmem:[%s1647 + $0x10] sm:$0xff] %vm733, %v1623
  %1651 = vst.msk [vmem:[%s1647 + $0x18] sm:$0x1f] %vm735, %v1624
  %1652 = vst.msk [vmem:[%s1647 + $0x20] sm:$0xff] %vm733, %v1625
  %1653 = vst.msk [vmem:[%s1647 + $0x28] sm:$0x1f] %vm735, %v1626
  %1654 = vst.msk [vmem:[%s1647 + $0x30] sm:$0xff] %vm733, %v1627
  %1655 = vst.msk [vmem:[%s1647 + $0x38] sm:$0x1f] %vm735, %v1628
  %1656 = vst.msk [vmem:[%s1647 + $0x40] sm:$0xff] %vm733, %v1629
  %1657 = vst.msk [vmem:[%s1647 + $0x48] sm:$0x1f] %vm735, %v1630
  %1658 = vst.msk [vmem:[%s1647 + $0x50] sm:$0xff] %vm733, %v1631
  %1659 = vst.msk [vmem:[%s1647 + $0x58] sm:$0x1f] %vm735, %v1632
  %1660 = vst.msk [vmem:[%s1647 + $0x60] sm:$0xff] %vm733, %v1633
  %1661 = vst.msk [vmem:[%s1647 + $0x68] sm:$0x1f] %vm735, %v1634
  %1662 = vst.msk [vmem:[%s1647 + $0x70] sm:$0xff] %vm733, %v1635
  %1663 = vst.msk [vmem:[%s1647 + $0x78] sm:$0x1f] %vm735, %v1636
  %1664 = vst.msk [vmem:[%s1647 + $0x80] sm:$0xff] %vm733, %v1637
  %1665 = vst.msk [vmem:[%s1647 + $0x88] sm:$0x1f] %vm735, %v1638
  %1666 = vst.msk [vmem:[%s1647 + $0x90] sm:$0xff] %vm733, %v1639
  %1667 = vst.msk [vmem:[%s1647 + $0x98] sm:$0x1f] %vm735, %v1640
  %1668 = vst.msk [vmem:[%s1647 + $0xa0] sm:$0xff] %vm733, %v1641
  %1669 = vst.msk [vmem:[%s1647 + $0xa8] sm:$0x1f] %vm735, %v1642
  %1670 = vst.msk [vmem:[%s1647 + $0xb0] sm:$0xff] %vm733, %v1643
  %1671 = vst.msk [vmem:[%s1647 + $0xb8] sm:$0x1f] %vm735, %v1644
  %1672 = vst.msk [vmem:[%s1647 + $0xc0] sm:$0xff] %vm733, %v1645
  %1673 = vst.msk [vmem:[%s1647 + $0xc8] sm:$0x1f] %vm735, %v1646
  %v1674 = vmax.f32 %v1621, 0.0
  %v1675 = vmax.f32 %v1622, 0.0
  %v1676 = vmax.f32 %v1623, 0.0
  %v1677 = vmax.f32 %v1624, 0.0
  %v1678 = vmax.f32 %v1625, 0.0
  %v1679 = vmax.f32 %v1626, 0.0
  %v1680 = vmax.f32 %v1627, 0.0
  %v1681 = vmax.f32 %v1628, 0.0
  %v1682 = vmax.f32 %v1629, 0.0
  %v1683 = vmax.f32 %v1630, 0.0
  %v1684 = vmax.f32 %v1631, 0.0
  %v1685 = vmax.f32 %v1632, 0.0
  %v1686 = vmax.f32 %v1633, 0.0
  %v1687 = vmax.f32 %v1634, 0.0
  %v1688 = vmax.f32 %v1635, 0.0
  %v1689 = vmax.f32 %v1636, 0.0
  %v1690 = vmax.f32 %v1637, 0.0
  %v1691 = vmax.f32 %v1638, 0.0
  %v1692 = vmax.f32 %v1639, 0.0
  %v1693 = vmax.f32 %v1640, 0.0
  %v1694 = vmax.f32 %v1641, 0.0
  %v1695 = vmax.f32 %v1642, 0.0
  %v1696 = vmax.f32 %v1643, 0.0
  %v1697 = vmax.f32 %v1644, 0.0
  %v1698 = vmax.f32 %v1645, 0.0
  %v1699 = vmax.f32 %v1646, 0.0
  %s1700 = scalar_lea.vmem %s2, 416
  %1701 = vst.msk [vmem:[%s1700] sm:$0xff] %vm733, %v1674
  %1702 = vst.msk [vmem:[%s1700 + $0x8] sm:$0x1f] %vm735, %v1675
  %1703 = vst.msk [vmem:[%s1700 + $0x10] sm:$0xff] %vm733, %v1676
  %1704 = vst.msk [vmem:[%s1700 + $0x18] sm:$0x1f] %vm735, %v1677
  %1705 = vst.msk [vmem:[%s1700 + $0x20] sm:$0xff] %vm733, %v1678
  %1706 = vst.msk [vmem:[%s1700 + $0x28] sm:$0x1f] %vm735, %v1679
  %1707 = vst.msk [vmem:[%s1700 + $0x30] sm:$0xff] %vm733, %v1680
  %1708 = vst.msk [vmem:[%s1700 + $0x38] sm:$0x1f] %vm735, %v1681
  %1709 = vst.msk [vmem:[%s1700 + $0x40] sm:$0xff] %vm733, %v1682
  %1710 = vst.msk [vmem:[%s1700 + $0x48] sm:$0x1f] %vm735, %v1683
  %1711 = vst.msk [vmem:[%s1700 + $0x50] sm:$0xff] %vm733, %v1684
  %1712 = vst.msk [vmem:[%s1700 + $0x58] sm:$0x1f] %vm735, %v1685
  %1713 = vst.msk [vmem:[%s1700 + $0x60] sm:$0xff] %vm733, %v1686
  %1714 = vst.msk [vmem:[%s1700 + $0x68] sm:$0x1f] %vm735, %v1687
  %1715 = vst.msk [vmem:[%s1700 + $0x70] sm:$0xff] %vm733, %v1688
  %1716 = vst.msk [vmem:[%s1700 + $0x78] sm:$0x1f] %vm735, %v1689
  %1717 = vst.msk [vmem:[%s1700 + $0x80] sm:$0xff] %vm733, %v1690
  %1718 = vst.msk [vmem:[%s1700 + $0x88] sm:$0x1f] %vm735, %v1691
  %1719 = vst.msk [vmem:[%s1700 + $0x90] sm:$0xff] %vm733, %v1692
  %1720 = vst.msk [vmem:[%s1700 + $0x98] sm:$0x1f] %vm735, %v1693
  %1721 = vst.msk [vmem:[%s1700 + $0xa0] sm:$0xff] %vm733, %v1694
  %1722 = vst.msk [vmem:[%s1700 + $0xa8] sm:$0x1f] %vm735, %v1695
  %1723 = vst.msk [vmem:[%s1700 + $0xb0] sm:$0xff] %vm733, %v1696
  %1724 = vst.msk [vmem:[%s1700 + $0xb8] sm:$0x1f] %vm735, %v1697
  %1725 = vst.msk [vmem:[%s1700 + $0xc0] sm:$0xff] %vm733, %v1698
  %1726 = vst.msk [vmem:[%s1700 + $0xc8] sm:$0x1f] %vm735, %v1699
  %v1727 = vadd.f32 %v813, %v189
  %v1728 = vadd.f32 %v814, %v188
  %v1729 = vadd.f32 %v815, %v192
  %v1730 = vadd.f32 %v816, %v191
  %v1731 = vadd.f32 %v817, %v195
  %v1732 = vadd.f32 %v818, %v194
  %v1733 = vadd.f32 %v819, %v198
  %v1734 = vadd.f32 %v820, %v197
  %v1735 = vadd.f32 %v821, %v201
  %v1736 = vadd.f32 %v822, %v200
  %v1737 = vadd.f32 %v823, %v204
  %v1738 = vadd.f32 %v824, %v203
  %v1739 = vadd.f32 %v825, %v207
  %v1740 = vadd.f32 %v826, %v206
  %v1741 = vadd.f32 %v827, %v210
  %v1742 = vadd.f32 %v828, %v209
  %v1743 = vadd.f32 %v829, %v213
  %v1744 = vadd.f32 %v830, %v212
  %v1745 = vadd.f32 %v831, %v216
  %v1746 = vadd.f32 %v832, %v215
  %v1747 = vadd.f32 %v833, %v219
  %v1748 = vadd.f32 %v834, %v218
  %v1749 = vadd.f32 %v835, %v222
  %v1750 = vadd.f32 %v836, %v221
  %v1751 = vadd.f32 %v837, %v225
  %v1752 = vadd.f32 %v838, %v224
  %v1753 = vadd.f32 %v1727, %v281
  %v1754 = vadd.f32 %v1728, %v280
  %v1755 = vadd.f32 %v1729, %v284
  %v1756 = vadd.f32 %v1730, %v283
  %v1757 = vadd.f32 %v1731, %v287
  %v1758 = vadd.f32 %v1732, %v286
  %v1759 = vadd.f32 %v1733, %v290
  %v1760 = vadd.f32 %v1734, %v289
  %v1761 = vadd.f32 %v1735, %v293
  %v1762 = vadd.f32 %v1736, %v292
  %v1763 = vadd.f32 %v1737, %v296
  %v1764 = vadd.f32 %v1738, %v295
  %v1765 = vadd.f32 %v1739, %v299
  %v1766 = vadd.f32 %v1740, %v298
  %v1767 = vadd.f32 %v1741, %v302
  %v1768 = vadd.f32 %v1742, %v301
  %v1769 = vadd.f32 %v1743, %v305
  %v1770 = vadd.f32 %v1744, %v304
  %v1771 = vadd.f32 %v1745, %v308
  %v1772 = vadd.f32 %v1746, %v307
  %v1773 = vadd.f32 %v1747, %v311
  %v1774 = vadd.f32 %v1748, %v310
  %v1775 = vadd.f32 %v1749, %v314
  %v1776 = vadd.f32 %v1750, %v313
  %v1777 = vadd.f32 %v1751, %v317
  %v1778 = vadd.f32 %v1752, %v316
  %v1779 = vadd.f32 %v1753, %v12
  %v1780 = vadd.f32 %v1754, %v13
  %v1781 = vadd.f32 %v1755, %v14
  %v1782 = vadd.f32 %v1756, %v15
  %v1783 = vadd.f32 %v1757, %v16
  %v1784 = vadd.f32 %v1758, %v17
  %v1785 = vadd.f32 %v1759, %v18
  %v1786 = vadd.f32 %v1760, %v19
  %v1787 = vadd.f32 %v1761, %v20
  %v1788 = vadd.f32 %v1762, %v21
  %v1789 = vadd.f32 %v1763, %v22
  %v1790 = vadd.f32 %v1764, %v23
  %v1791 = vadd.f32 %v1765, %v24
  %v1792 = vadd.f32 %v1766, %v25
  %v1793 = vadd.f32 %v1767, %v26
  %v1794 = vadd.f32 %v1768, %v27
  %v1795 = vadd.f32 %v1769, %v28
  %v1796 = vadd.f32 %v1770, %v29
  %v1797 = vadd.f32 %v1771, %v30
  %v1798 = vadd.f32 %v1772, %v31
  %v1799 = vadd.f32 %v1773, %v32
  %v1800 = vadd.f32 %v1774, %v33
  %v1801 = vadd.f32 %v1775, %v34
  %v1802 = vadd.f32 %v1776, %v35
  %v1803 = vadd.f32 %v1777, %v36
  %v1804 = vadd.f32 %v1778, %v37
  %v1805 = vadd.f32 %v1779, %v100
  %v1806 = vadd.f32 %v1780, %v99
  %v1807 = vadd.f32 %v1781, %v103
  %v1808 = vadd.f32 %v1782, %v102
  %v1809 = vadd.f32 %v1783, %v106
  %v1810 = vadd.f32 %v1784, %v105
  %v1811 = vadd.f32 %v1785, %v109
  %v1812 = vadd.f32 %v1786, %v108
  %v1813 = vadd.f32 %v1787, %v112
  %v1814 = vadd.f32 %v1788, %v111
  %v1815 = vadd.f32 %v1789, %v115
  %v1816 = vadd.f32 %v1790, %v114
  %v1817 = vadd.f32 %v1791, %v118
  %v1818 = vadd.f32 %v1792, %v117
  %v1819 = vadd.f32 %v1793, %v121
  %v1820 = vadd.f32 %v1794, %v120
  %v1821 = vadd.f32 %v1795, %v124
  %v1822 = vadd.f32 %v1796, %v123
  %v1823 = vadd.f32 %v1797, %v127
  %v1824 = vadd.f32 %v1798, %v126
  %v1825 = vadd.f32 %v1799, %v130
  %v1826 = vadd.f32 %v1800, %v129
  %v1827 = vadd.f32 %v1801, %v133
  %v1828 = vadd.f32 %v1802, %v132
  %v1829 = vadd.f32 %v1803, %v400
  %v1830 = vadd.f32 %v1804, %v399
  %v1831 = vadd.f32 %v1805, %v192
  %v1832 = vadd.f32 %v1806, %v191
  %v1833 = vadd.f32 %v1807, %v195
  %v1834 = vadd.f32 %v1808, %v194
  %v1835 = vadd.f32 %v1809, %v198
  %v1836 = vadd.f32 %v1810, %v197
  %v1837 = vadd.f32 %v1811, %v201
  %v1838 = vadd.f32 %v1812, %v200
  %v1839 = vadd.f32 %v1813, %v204
  %v1840 = vadd.f32 %v1814, %v203
  %v1841 = vadd.f32 %v1815, %v207
  %v1842 = vadd.f32 %v1816, %v206
  %v1843 = vadd.f32 %v1817, %v210
  %v1844 = vadd.f32 %v1818, %v209
  %v1845 = vadd.f32 %v1819, %v213
  %v1846 = vadd.f32 %v1820, %v212
  %v1847 = vadd.f32 %v1821, %v216
  %v1848 = vadd.f32 %v1822, %v215
  %v1849 = vadd.f32 %v1823, %v219
  %v1850 = vadd.f32 %v1824, %v218
  %v1851 = vadd.f32 %v1825, %v222
  %v1852 = vadd.f32 %v1826, %v221
  %v1853 = vadd.f32 %v1827, %v225
  %v1854 = vadd.f32 %v1828, %v224
  %v1855 = vadd.f32 %v1829, %v431
  %v1856 = vadd.f32 %v1830, %v430
  %v1857 = vadd.f32 %v1831, %v284
  %v1858 = vadd.f32 %v1832, %v283
  %v1859 = vadd.f32 %v1833, %v287
  %v1860 = vadd.f32 %v1834, %v286
  %v1861 = vadd.f32 %v1835, %v290
  %v1862 = vadd.f32 %v1836, %v289
  %v1863 = vadd.f32 %v1837, %v293
  %v1864 = vadd.f32 %v1838, %v292
  %v1865 = vadd.f32 %v1839, %v296
  %v1866 = vadd.f32 %v1840, %v295
  %v1867 = vadd.f32 %v1841, %v299
  %v1868 = vadd.f32 %v1842, %v298
  %v1869 = vadd.f32 %v1843, %v302
  %v1870 = vadd.f32 %v1844, %v301
  %v1871 = vadd.f32 %v1845, %v305
  %v1872 = vadd.f32 %v1846, %v304
  %v1873 = vadd.f32 %v1847, %v308
  %v1874 = vadd.f32 %v1848, %v307
  %v1875 = vadd.f32 %v1849, %v311
  %v1876 = vadd.f32 %v1850, %v310
  %v1877 = vadd.f32 %v1851, %v314
  %v1878 = vadd.f32 %v1852, %v313
  %v1879 = vadd.f32 %v1853, %v317
  %v1880 = vadd.f32 %v1854, %v316
  %v1881 = vadd.f32 %v1855, %v462
  %v1882 = vadd.f32 %v1856, %v461
  %v1883 = vsub.f32 %v1857, %v14
  %v1884 = vsub.f32 %v1858, %v15
  %v1885 = vsub.f32 %v1859, %v16
  %v1886 = vsub.f32 %v1860, %v17
  %v1887 = vsub.f32 %v1861, %v18
  %v1888 = vsub.f32 %v1862, %v19
  %v1889 = vsub.f32 %v1863, %v20
  %v1890 = vsub.f32 %v1864, %v21
  %v1891 = vsub.f32 %v1865, %v22
  %v1892 = vsub.f32 %v1866, %v23
  %v1893 = vsub.f32 %v1867, %v24
  %v1894 = vsub.f32 %v1868, %v25
  %v1895 = vsub.f32 %v1869, %v26
  %v1896 = vsub.f32 %v1870, %v27
  %v1897 = vsub.f32 %v1871, %v28
  %v1898 = vsub.f32 %v1872, %v29
  %v1899 = vsub.f32 %v1873, %v30
  %v1900 = vsub.f32 %v1874, %v31
  %v1901 = vsub.f32 %v1875, %v32
  %v1902 = vsub.f32 %v1876, %v33
  %v1903 = vsub.f32 %v1877, %v34
  %v1904 = vsub.f32 %v1878, %v35
  %v1905 = vsub.f32 %v1879, %v36
  %v1906 = vsub.f32 %v1880, %v37
  %v1907 = vsub.f32 %v1881, %v38
  %v1908 = vsub.f32 %v1882, %v39
  %v1909 = vsub.f32 %v1883, %v103
  %v1910 = vsub.f32 %v1884, %v102
  %v1911 = vsub.f32 %v1885, %v106
  %v1912 = vsub.f32 %v1886, %v105
  %v1913 = vsub.f32 %v1887, %v109
  %v1914 = vsub.f32 %v1888, %v108
  %v1915 = vsub.f32 %v1889, %v112
  %v1916 = vsub.f32 %v1890, %v111
  %v1917 = vsub.f32 %v1891, %v115
  %v1918 = vsub.f32 %v1892, %v114
  %v1919 = vsub.f32 %v1893, %v118
  %v1920 = vsub.f32 %v1894, %v117
  %v1921 = vsub.f32 %v1895, %v121
  %v1922 = vsub.f32 %v1896, %v120
  %v1923 = vsub.f32 %v1897, %v124
  %v1924 = vsub.f32 %v1898, %v123
  %v1925 = vsub.f32 %v1899, %v127
  %v1926 = vsub.f32 %v1900, %v126
  %v1927 = vsub.f32 %v1901, %v130
  %v1928 = vsub.f32 %v1902, %v129
  %v1929 = vsub.f32 %v1903, %v133
  %v1930 = vsub.f32 %v1904, %v132
  %v1931 = vsub.f32 %v1905, %v400
  %v1932 = vsub.f32 %v1906, %v399
  %v1933 = vsub.f32 %v1907, %v521
  %v1934 = vsub.f32 %v1908, %v520
  %v1935 = vsub.f32 %v1909, %v195
  %v1936 = vsub.f32 %v1910, %v194
  %v1937 = vsub.f32 %v1911, %v198
  %v1938 = vsub.f32 %v1912, %v197
  %v1939 = vsub.f32 %v1913, %v201
  %v1940 = vsub.f32 %v1914, %v200
  %v1941 = vsub.f32 %v1915, %v204
  %v1942 = vsub.f32 %v1916, %v203
  %v1943 = vsub.f32 %v1917, %v207
  %v1944 = vsub.f32 %v1918, %v206
  %v1945 = vsub.f32 %v1919, %v210
  %v1946 = vsub.f32 %v1920, %v209
  %v1947 = vsub.f32 %v1921, %v213
  %v1948 = vsub.f32 %v1922, %v212
  %v1949 = vsub.f32 %v1923, %v216
  %v1950 = vsub.f32 %v1924, %v215
  %v1951 = vsub.f32 %v1925, %v219
  %v1952 = vsub.f32 %v1926, %v218
  %v1953 = vsub.f32 %v1927, %v222
  %v1954 = vsub.f32 %v1928, %v221
  %v1955 = vsub.f32 %v1929, %v225
  %v1956 = vsub.f32 %v1930, %v224
  %v1957 = vsub.f32 %v1931, %v431
  %v1958 = vsub.f32 %v1932, %v430
  %v1959 = vsub.f32 %v1933, %v552
  %v1960 = vsub.f32 %v1934, %v551
  %v1961 = vsub.f32 %v1935, %v287
  %v1962 = vsub.f32 %v1936, %v286
  %v1963 = vsub.f32 %v1937, %v290
  %v1964 = vsub.f32 %v1938, %v289
  %v1965 = vsub.f32 %v1939, %v293
  %v1966 = vsub.f32 %v1940, %v292
  %v1967 = vsub.f32 %v1941, %v296
  %v1968 = vsub.f32 %v1942, %v295
  %v1969 = vsub.f32 %v1943, %v299
  %v1970 = vsub.f32 %v1944, %v298
  %v1971 = vsub.f32 %v1945, %v302
  %v1972 = vsub.f32 %v1946, %v301
  %v1973 = vsub.f32 %v1947, %v305
  %v1974 = vsub.f32 %v1948, %v304
  %v1975 = vsub.f32 %v1949, %v308
  %v1976 = vsub.f32 %v1950, %v307
  %v1977 = vsub.f32 %v1951, %v311
  %v1978 = vsub.f32 %v1952, %v310
  %v1979 = vsub.f32 %v1953, %v314
  %v1980 = vsub.f32 %v1954, %v313
  %v1981 = vsub.f32 %v1955, %v317
  %v1982 = vsub.f32 %v1956, %v316
  %v1983 = vsub.f32 %v1957, %v462
  %v1984 = vsub.f32 %v1958, %v461
  %v1985 = vsub.f32 %v1959, %v583
  %v1986 = vsub.f32 %v1960, %v582
  %v1987 = vsub.f32 %v1961, %v16
  %v1988 = vsub.f32 %v1962, %v17
  %v1989 = vsub.f32 %v1963, %v18
  %v1990 = vsub.f32 %v1964, %v19
  %v1991 = vsub.f32 %v1965, %v20
  %v1992 = vsub.f32 %v1966, %v21
  %v1993 = vsub.f32 %v1967, %v22
  %v1994 = vsub.f32 %v1968, %v23
  %v1995 = vsub.f32 %v1969, %v24
  %v1996 = vsub.f32 %v1970, %v25
  %v1997 = vsub.f32 %v1971, %v26
  %v1998 = vsub.f32 %v1972, %v27
  %v1999 = vsub.f32 %v1973, %v28
  %v2000 = vsub.f32 %v1974, %v29
  %v2001 = vsub.f32 %v1975, %v30
  %v2002 = vsub.f32 %v1976, %v31
  %v2003 = vsub.f32 %v1977, %v32
  %v2004 = vsub.f32 %v1978, %v33
  %v2005 = vsub.f32 %v1979, %v34
  %v2006 = vsub.f32 %v1980, %v35
  %v2007 = vsub.f32 %v1981, %v36
  %v2008 = vsub.f32 %v1982, %v37
  %v2009 = vsub.f32 %v1983, %v38
  %v2010 = vsub.f32 %v1984, %v39
  %v2011 = vsub.f32 %v1985, %v40
  %v2012 = vsub.f32 %v1986, %v41
  %v2013 = vsub.f32 %v1987, %v106
  %v2014 = vsub.f32 %v1988, %v105
  %v2015 = vsub.f32 %v1989, %v109
  %v2016 = vsub.f32 %v1990, %v108
  %v2017 = vsub.f32 %v1991, %v112
  %v2018 = vsub.f32 %v1992, %v111
  %v2019 = vsub.f32 %v1993, %v115
  %v2020 = vsub.f32 %v1994, %v114
  %v2021 = vsub.f32 %v1995, %v118
  %v2022 = vsub.f32 %v1996, %v117
  %v2023 = vsub.f32 %v1997, %v121
  %v2024 = vsub.f32 %v1998, %v120
  %v2025 = vsub.f32 %v1999, %v124
  %v2026 = vsub.f32 %v2000, %v123
  %v2027 = vsub.f32 %v2001, %v127
  %v2028 = vsub.f32 %v2002, %v126
  %v2029 = vsub.f32 %v2003, %v130
  %v2030 = vsub.f32 %v2004, %v129
  %v2031 = vsub.f32 %v2005, %v133
  %v2032 = vsub.f32 %v2006, %v132
  %v2033 = vsub.f32 %v2007, %v400
  %v2034 = vsub.f32 %v2008, %v399
  %v2035 = vsub.f32 %v2009, %v521
  %v2036 = vsub.f32 %v2010, %v520
  %v2037 = vsub.f32 %v2011, %v642
  %v2038 = vsub.f32 %v2012, %v641
  %v2039 = vsub.f32 %v2013, %v198
  %v2040 = vsub.f32 %v2014, %v197
  %v2041 = vsub.f32 %v2015, %v201
  %v2042 = vsub.f32 %v2016, %v200
  %v2043 = vsub.f32 %v2017, %v204
  %v2044 = vsub.f32 %v2018, %v203
  %v2045 = vsub.f32 %v2019, %v207
  %v2046 = vsub.f32 %v2020, %v206
  %v2047 = vsub.f32 %v2021, %v210
  %v2048 = vsub.f32 %v2022, %v209
  %v2049 = vsub.f32 %v2023, %v213
  %v2050 = vsub.f32 %v2024, %v212
  %v2051 = vsub.f32 %v2025, %v216
  %v2052 = vsub.f32 %v2026, %v215
  %v2053 = vsub.f32 %v2027, %v219
  %v2054 = vsub.f32 %v2028, %v218
  %v2055 = vsub.f32 %v2029, %v222
  %v2056 = vsub.f32 %v2030, %v221
  %v2057 = vsub.f32 %v2031, %v225
  %v2058 = vsub.f32 %v2032, %v224
  %v2059 = vsub.f32 %v2033, %v431
  %v2060 = vsub.f32 %v2034, %v430
  %v2061 = vsub.f32 %v2035, %v552
  %v2062 = vsub.f32 %v2036, %v551
  %v2063 = vsub.f32 %v2037, %v673
  %v2064 = vsub.f32 %v2038, %v672
  %v2065 = vsub.f32 %v2039, %v290
  %v2066 = vsub.f32 %v2040, %v289
  %v2067 = vsub.f32 %v2041, %v293
  %v2068 = vsub.f32 %v2042, %v292
  %v2069 = vsub.f32 %v2043, %v296
  %v2070 = vsub.f32 %v2044, %v295
  %v2071 = vsub.f32 %v2045, %v299
  %v2072 = vsub.f32 %v2046, %v298
  %v2073 = vsub.f32 %v2047, %v302
  %v2074 = vsub.f32 %v2048, %v301
  %v2075 = vsub.f32 %v2049, %v305
  %v2076 = vsub.f32 %v2050, %v304
  %v2077 = vsub.f32 %v2051, %v308
  %v2078 = vsub.f32 %v2052, %v307
  %v2079 = vsub.f32 %v2053, %v311
  %v2080 = vsub.f32 %v2054, %v310
  %v2081 = vsub.f32 %v2055, %v314
  %v2082 = vsub.f32 %v2056, %v313
  %v2083 = vsub.f32 %v2057, %v317
  %v2084 = vsub.f32 %v2058, %v316
  %v2085 = vsub.f32 %v2059, %v462
  %v2086 = vsub.f32 %v2060, %v461
  %v2087 = vsub.f32 %v2061, %v583
  %v2088 = vsub.f32 %v2062, %v582
  %v2089 = vsub.f32 %v2063, %v704
  %v2090 = vsub.f32 %v2064, %v703
  %s2091 = scalar_lea.vmem %s1, 624
  %2092 = vst.msk [vmem:[%s2091] sm:$0xff] %vm733, %v2065
  %2093 = vst.msk [vmem:[%s2091 + $0x8] sm:$0x1f] %vm735, %v2066
  %2094 = vst.msk [vmem:[%s2091 + $0x10] sm:$0xff] %vm733, %v2067
  %2095 = vst.msk [vmem:[%s2091 + $0x18] sm:$0x1f] %vm735, %v2068
  %2096 = vst.msk [vmem:[%s2091 + $0x20] sm:$0xff] %vm733, %v2069
  %2097 = vst.msk [vmem:[%s2091 + $0x28] sm:$0x1f] %vm735, %v2070
  %2098 = vst.msk [vmem:[%s2091 + $0x30] sm:$0xff] %vm733, %v2071
  %2099 = vst.msk [vmem:[%s2091 + $0x38] sm:$0x1f] %vm735, %v2072
  %2100 = vst.msk [vmem:[%s2091 + $0x40] sm:$0xff] %vm733, %v2073
  %2101 = vst.msk [vmem:[%s2091 + $0x48] sm:$0x1f] %vm735, %v2074
  %2102 = vst.msk [vmem:[%s2091 + $0x50] sm:$0xff] %vm733, %v2075
  %2103 = vst.msk [vmem:[%s2091 + $0x58] sm:$0x1f] %vm735, %v2076
  %2104 = vst.msk [vmem:[%s2091 + $0x60] sm:$0xff] %vm733, %v2077
  %2105 = vst.msk [vmem:[%s2091 + $0x68] sm:$0x1f] %vm735, %v2078
  %2106 = vst.msk [vmem:[%s2091 + $0x70] sm:$0xff] %vm733, %v2079
  %2107 = vst.msk [vmem:[%s2091 + $0x78] sm:$0x1f] %vm735, %v2080
  %2108 = vst.msk [vmem:[%s2091 + $0x80] sm:$0xff] %vm733, %v2081
  %2109 = vst.msk [vmem:[%s2091 + $0x88] sm:$0x1f] %vm735, %v2082
  %2110 = vst.msk [vmem:[%s2091 + $0x90] sm:$0xff] %vm733, %v2083
  %2111 = vst.msk [vmem:[%s2091 + $0x98] sm:$0x1f] %vm735, %v2084
  %2112 = vst.msk [vmem:[%s2091 + $0xa0] sm:$0xff] %vm733, %v2085
  %2113 = vst.msk [vmem:[%s2091 + $0xa8] sm:$0x1f] %vm735, %v2086
  %2114 = vst.msk [vmem:[%s2091 + $0xb0] sm:$0xff] %vm733, %v2087
  %2115 = vst.msk [vmem:[%s2091 + $0xb8] sm:$0x1f] %vm735, %v2088
  %2116 = vst.msk [vmem:[%s2091 + $0xc0] sm:$0xff] %vm733, %v2089
  %2117 = vst.msk [vmem:[%s2091 + $0xc8] sm:$0x1f] %vm735, %v2090
  %v2118 = vmax.f32 %v2065, 0.0
  %v2119 = vmax.f32 %v2066, 0.0
  %v2120 = vmax.f32 %v2067, 0.0
  %v2121 = vmax.f32 %v2068, 0.0
  %v2122 = vmax.f32 %v2069, 0.0
  %v2123 = vmax.f32 %v2070, 0.0
  %v2124 = vmax.f32 %v2071, 0.0
  %v2125 = vmax.f32 %v2072, 0.0
  %v2126 = vmax.f32 %v2073, 0.0
  %v2127 = vmax.f32 %v2074, 0.0
  %v2128 = vmax.f32 %v2075, 0.0
  %v2129 = vmax.f32 %v2076, 0.0
  %v2130 = vmax.f32 %v2077, 0.0
  %v2131 = vmax.f32 %v2078, 0.0
  %v2132 = vmax.f32 %v2079, 0.0
  %v2133 = vmax.f32 %v2080, 0.0
  %v2134 = vmax.f32 %v2081, 0.0
  %v2135 = vmax.f32 %v2082, 0.0
  %v2136 = vmax.f32 %v2083, 0.0
  %v2137 = vmax.f32 %v2084, 0.0
  %v2138 = vmax.f32 %v2085, 0.0
  %v2139 = vmax.f32 %v2086, 0.0
  %v2140 = vmax.f32 %v2087, 0.0
  %v2141 = vmax.f32 %v2088, 0.0
  %v2142 = vmax.f32 %v2089, 0.0
  %v2143 = vmax.f32 %v2090, 0.0
  %s2144 = scalar_lea.vmem %s2, 624
  %2145 = vst.msk [vmem:[%s2144] sm:$0xff] %vm733, %v2118
  %2146 = vst.msk [vmem:[%s2144 + $0x8] sm:$0x1f] %vm735, %v2119
  %2147 = vst.msk [vmem:[%s2144 + $0x10] sm:$0xff] %vm733, %v2120
  %2148 = vst.msk [vmem:[%s2144 + $0x18] sm:$0x1f] %vm735, %v2121
  %2149 = vst.msk [vmem:[%s2144 + $0x20] sm:$0xff] %vm733, %v2122
  %2150 = vst.msk [vmem:[%s2144 + $0x28] sm:$0x1f] %vm735, %v2123
  %2151 = vst.msk [vmem:[%s2144 + $0x30] sm:$0xff] %vm733, %v2124
  %2152 = vst.msk [vmem:[%s2144 + $0x38] sm:$0x1f] %vm735, %v2125
  %2153 = vst.msk [vmem:[%s2144 + $0x40] sm:$0xff] %vm733, %v2126
  %2154 = vst.msk [vmem:[%s2144 + $0x48] sm:$0x1f] %vm735, %v2127
  %2155 = vst.msk [vmem:[%s2144 + $0x50] sm:$0xff] %vm733, %v2128
  %2156 = vst.msk [vmem:[%s2144 + $0x58] sm:$0x1f] %vm735, %v2129
  %2157 = vst.msk [vmem:[%s2144 + $0x60] sm:$0xff] %vm733, %v2130
  %2158 = vst.msk [vmem:[%s2144 + $0x68] sm:$0x1f] %vm735, %v2131
  %2159 = vst.msk [vmem:[%s2144 + $0x70] sm:$0xff] %vm733, %v2132
  %2160 = vst.msk [vmem:[%s2144 + $0x78] sm:$0x1f] %vm735, %v2133
  %2161 = vst.msk [vmem:[%s2144 + $0x80] sm:$0xff] %vm733, %v2134
  %2162 = vst.msk [vmem:[%s2144 + $0x88] sm:$0x1f] %vm735, %v2135
  %2163 = vst.msk [vmem:[%s2144 + $0x90] sm:$0xff] %vm733, %v2136
  %2164 = vst.msk [vmem:[%s2144 + $0x98] sm:$0x1f] %vm735, %v2137
  %2165 = vst.msk [vmem:[%s2144 + $0xa0] sm:$0xff] %vm733, %v2138
  %2166 = vst.msk [vmem:[%s2144 + $0xa8] sm:$0x1f] %vm735, %v2139
  %2167 = vst.msk [vmem:[%s2144 + $0xb0] sm:$0xff] %vm733, %v2140
  %2168 = vst.msk [vmem:[%s2144 + $0xb8] sm:$0x1f] %vm735, %v2141
  %2169 = vst.msk [vmem:[%s2144 + $0xc0] sm:$0xff] %vm733, %v2142
  %2170 = vst.msk [vmem:[%s2144 + $0xc8] sm:$0x1f] %vm735, %v2143
  // Predicated region
  $region6: #{tpu_custom_call.1} parent=0 // pred_check
    _
  $region7: #{tpu_custom_call.1} parent=0 // pred_check_branch
    %2172 = sbr.rel (0) target = $region9
  $region8: #{tpu_custom_call.1} parent=0 // pred_region
    _
  $region9: #{tpu_custom_call.1} parent=0 // pred_fallthru
    _
  // Predicated region
  $region10: #{tpu_custom_call.1} parent=0 // pred_check
    _
  $region11: #{tpu_custom_call.1} parent=0 // pred_check_branch
    %2174 = sbr.rel (0) target = $region13
  $region12: #{tpu_custom_call.1} parent=0 // pred_region
    _
  $region13: #{tpu_custom_call.1} parent=0 // pred_fallthru
    _
  // Predicated region
  $region14: #{tpu_custom_call.1} parent=0 // pred_check
    _
  $region15: #{tpu_custom_call.1} parent=0 // pred_check_branch
    %2176 = sbr.rel (0) target = $region17
  $region16: #{tpu_custom_call.1} parent=0 // pred_region
    _
  $region17: #{tpu_custom_call.1} parent=0 // pred_fallthru
    _
  // Predicated region
  $region18: #{tpu_custom_call.1} parent=0 // pred_check
    _
  $region19: #{tpu_custom_call.1} parent=0 // pred_check_branch
    %2178 = sbr.rel (0) target = $region21
  $region20: #{tpu_custom_call.1} parent=0 // pred_region
    _
  $region21: #{tpu_custom_call.1} parent=0 // pred_fallthru
    _

</llo_original>
